<compile_context>
chip_gen: v7x
topology: tpu7x:2x2x1
jax: 0.10.0
libtpu: 0.0.40
codegen_flags: <defaults>
</compile_context>

<pallas_src>
import functools

import jax
import jax.numpy as jnp
from jax import lax
from jax.experimental import pallas as pl
from jax.experimental.pallas import tpu as pltpu


def _round_up(x, m):
    return ((x + m - 1) // m) * m


# ---------------------------------------------------------------------------
# Pallas kernel: complex per-mode channel contraction
#   out[b, o, m] = sum_i x[b, i, m] * w[i, o, m]          (complex)
# ---------------------------------------------------------------------------
def _spectral_mul_kernel(xr_ref, xi_ref, wr_ref, wi_ref, or_ref, oi_ref,
                         *, cout_chunk, lane_chunk, cin_unroll):
    """One (mode-tile, Cin-block) grid step.

    xr/xi : (cin_blk, B,      tm)   stream dtype (f32 or bf16)
    wr/wi : (cin_blk, Cout_p, tm)   stream dtype
    or/oi : (B, Cout_p, tm)         f32 resident accumulator across the Cin axis
    """
    c_step = pl.program_id(1)

    @pl.when(c_step == 0)
    def _init():
        or_ref[...] = jnp.zeros_like(or_ref)
        oi_ref[...] = jnp.zeros_like(oi_ref)

    cin_blk, B, tm = xr_ref.shape
    cout_p = wr_ref.shape[1]
    n_oc = cout_p // cout_chunk
    n_lc = tm // lane_chunk

    # Static loops over batch and Cout sublane-chunks keep every sublane offset
    # static; only the lane offset (well supported) and the Cin index (leading
    # dim) are dynamic.  Per chunk the accumulator is a small register tile
    # (cout_chunk x lane_chunk <= 8 sublanes x 512 lanes), so the Cin loop
    # stays VALU-bound instead of spilling to VMEM.
    for b in range(B):
        for oc in range(n_oc):
            o0 = oc * cout_chunk

            def lc_body(lc, carry, b=b, o0=o0):
                l0 = pl.multiple_of(lc * lane_chunk, lane_chunk)

                def cin_body(i, acc):
                    ar, ai = acc
                    xr = xr_ref[i, b:b + 1, pl.ds(l0, lane_chunk)].astype(jnp.float32)
                    xi = xi_ref[i, b:b + 1, pl.ds(l0, lane_chunk)].astype(jnp.float32)
                    wr = wr_ref[i, o0:o0 + cout_chunk,
                                pl.ds(l0, lane_chunk)].astype(jnp.float32)
                    wi = wi_ref[i, o0:o0 + cout_chunk,
                                pl.ds(l0, lane_chunk)].astype(jnp.float32)
                    # complex MAC: (xr + i xi) * (wr + i wi)
                    ar = ar + (xr * wr - xi * wi)
                    ai = ai + (xr * wi + xi * wr)
                    return ar, ai

                ar0 = or_ref[b, o0:o0 + cout_chunk, pl.ds(l0, lane_chunk)]
                ai0 = oi_ref[b, o0:o0 + cout_chunk, pl.ds(l0, lane_chunk)]
                ar, ai = lax.fori_loop(0, cin_blk, cin_body, (ar0, ai0),
                                       unroll=cin_unroll)
                or_ref[b, o0:o0 + cout_chunk, pl.ds(l0, lane_chunk)] = ar
                oi_ref[b, o0:o0 + cout_chunk, pl.ds(l0, lane_chunk)] = ai
                return carry

            lax.fori_loop(0, n_lc, lc_body, 0)


# ---------------------------------------------------------------------------
# Generation-aware tile planning
# ---------------------------------------------------------------------------
def _vmem_limit_bytes():
    cap = 0
    try:
        cap = int(pltpu.get_tpu_info().vmem_capacity_bytes)
    except Exception:
        cap = 0
    if cap <= 0:
        cap = 64 * 1024 * 1024            # conservative (v7x-sized) fallback
    # ~25% headroom for Mosaic-internal scratch; never request above ~100 MiB.
    # 128 MiB parts (v5e/v6e) -> 96 MiB; 64 MiB parts (v7x) -> 48 MiB.
    return min((cap // 4) * 3, 100 * 1024 * 1024)


def _plan_tiles(B, Cin, Cout_p, M128, stream_itemsize):
    """Pick (mode tile tm, Cin block) so double-buffered tiles fit VMEM."""
    vmem_limit = _vmem_limit_bytes()
    budget = (vmem_limit * 4) // 5        # slack under the scoped limit

    def fits(tm, cb):
        in_bytes = 2 * cb * (B + Cout_p) * tm * stream_itemsize   # xr/xi + wr/wi
        out_bytes = 2 * B * Cout_p * tm * 4                        # or/oi (f32)
        return 2 * (in_bytes + out_bytes) <= budget                # double buffered

    k = M128 // 128
    divisors = sorted((d for d in range(1, k + 1) if k % d == 0), reverse=True)

    cb_min = max(1, min(Cin, 8))
    tm = 128
    for d in divisors:
        if k >= 2 and k // d < 2:
            continue       # keep >= 2 "parallel" mode steps (v7x has 2 TCs/chip)
        if fits(128 * d, cb_min):
            tm = 128 * d
            break

    # Grow the Cin block as large as VMEM allows (fewer accumulator VMEM round
    # trips); Cin is padded up to a multiple of the block by the caller.
    candidates = []
    cb = Cin
    while cb >= 1:
        candidates.append(cb)
        if cb == 1:
            break
        cb = (cb + 1) // 2
    cin_blk = 1
    for cb in candidates:
        if fits(tm, cb):
            cin_blk = cb
            break

    return tm, cin_blk, vmem_limit


def _lane_chunk_for(tm):
    for c in (4, 3, 2, 1):                 # register accumulator <= 512 lanes
        if (tm // 128) % c == 0:
            return 128 * c
    return 128


def _cin_unroll_for(cin_blk):
    for u in (4, 2, 1):                    # bounded unroll (no full-Cin unroll)
        if cin_blk % u == 0:
            return u
    return 1


def _compl_mul_modes_pallas(xr, xi, wr, wi, *, tm, cin_blk, vmem_limit):
    """xr/xi: (Cin_p, B, Mp); wr/wi: (Cin_p, Cout_p, Mp) -> 2x (B, Cout_p, Mp) f32."""
    Cin_p, B, Mp = xr.shape
    Cout_p = wr.shape[1]
    grid = (Mp // tm, Cin_p // cin_blk)    # ("parallel" modes, "arbitrary" Cin)

    kernel = functools.partial(
        _spectral_mul_kernel,
        cout_chunk=8,
        lane_chunk=_lane_chunk_for(tm),
        cin_unroll=_cin_unroll_for(cin_blk),
    )

    x_spec = pl.BlockSpec((cin_blk, B, tm), lambda m, c: (c, 0, m))
    w_spec = pl.BlockSpec((cin_blk, Cout_p, tm), lambda m, c: (c, 0, m))
    o_spec = pl.BlockSpec((B, Cout_p, tm), lambda m, c: (0, 0, m))

    flops = 8 * B * Cin_p * Cout_p * Mp
    bytes_accessed = (Mp * 2 * Cin_p * (B + Cout_p) * xr.dtype.itemsize
                      + Mp * 2 * B * Cout_p * 4)

    return pl.pallas_call(
        kernel,
        grid=grid,
        in_specs=[x_spec, x_spec, w_spec, w_spec],
        out_specs=[o_spec, o_spec],
        out_shape=[jax.ShapeDtypeStruct((B, Cout_p, Mp), jnp.float32)] * 2,
        compiler_params=pltpu.CompilerParams(
            dimension_semantics=("parallel", "arbitrary"),
            vmem_limit_bytes=int(vmem_limit),
        ),
        cost_estimate=pl.CostEstimate(
            flops=flops, transcendentals=0, bytes_accessed=bytes_accessed),
    )(xr, xi, wr, wi)


# ---------------------------------------------------------------------------
# Wrapper: FFT -> Pallas contraction on the 4 corner mode blocks -> IFFT
# ---------------------------------------------------------------------------
def preferred_stream_dtype():
    """bf16 streaming only on generations with a native bf16 VPU (v6e / v7x)."""
    try:
        kind = jax.devices()[0].device_kind.lower()
    except Exception:
        return jnp.float32
    if "v6" in kind or "v7" in kind:
        return jnp.bfloat16
    return jnp.float32


@functools.partial(jax.jit,
                   static_argnames=("modes1", "modes2", "modes3", "stream_dtype"))
def spectral_conv3d(x, w1, w2, w3, w4, *, modes1, modes2, modes3,
                    stream_dtype=jnp.float32):
    """x: (B, Cin, S1, S2, S3) float32; w*: (Cin, Cout, m1, m2, m3) complex64."""
    B, Cin, S1, S2, S3 = x.shape
    Cout = w1.shape[1]
    m1, m2, m3 = modes1, modes2, modes3
    M = m1 * m2 * m3
    M4 = 4 * M
    M128 = _round_up(M4, 128)          # lane padding only (no up-to-tm waste)
    Cout_p = _round_up(Cout, 8)        # full sublane occupancy of w / out tiles

    sdt = jnp.dtype(stream_dtype)
    tm, cin_blk, vmem_limit = _plan_tiles(B, Cin, Cout_p, M128, sdt.itemsize)
    Cin_p = _round_up(Cin, cin_blk)

    # Forward real FFT over the last three dims (plain JAX).
    # TODO(synk): the FFT / inverse FFT stay in XLA (no Pallas FFT primitive).
    x_ft = jnp.fft.rfftn(x, axes=(-3, -2, -1))     # (B, Cin, S1, S2, S3//2+1)

    # 4 low/high-frequency corner blocks -> (Cin, B, M128) lane-dense layout.
    # Transpose folded into the per-corner reshape; zero pad folded into the
    # single concat (one materialization).
    def corner(c):
        return jnp.transpose(c, (1, 0, 2, 3, 4)).reshape(Cin, B, M)

    parts = [
        corner(x_ft[:, :, :m1, :m2, :m3]),
        corner(x_ft[:, :, -m1:, :m2, :m3]),
        corner(x_ft[:, :, :m1, -m2:, :m3]),
        corner(x_ft[:, :, -m1:, -m2:, :m3]),
    ]
    if M128 > M4:
        parts.append(jnp.zeros((Cin, B, M128 - M4), x_ft.dtype))
    Xc = jnp.concatenate(parts, axis=-1)           # (Cin, B, M128)

    wparts = [w.reshape(Cin, Cout, M) for w in (w1, w2, w3, w4)]
    if M128 > M4:
        wparts.append(jnp.zeros((Cin, Cout, M128 - M4), w1.dtype))
    Wc = jnp.concatenate(wparts, axis=-1)          # (Cin, Cout, M128)

    xr = jnp.real(Xc).astype(sdt)
    xi = jnp.imag(Xc).astype(sdt)
    wr = jnp.real(Wc).astype(sdt)
    wi = jnp.imag(Wc).astype(sdt)

    if Cin_p > Cin:
        xpad = ((0, Cin_p - Cin), (0, 0), (0, 0))
        xr = jnp.pad(xr, xpad)
        xi = jnp.pad(xi, xpad)
    if Cin_p > Cin or Cout_p > Cout:
        wpad = ((0, Cin_p - Cin), (0, Cout_p - Cout), (0, 0))
        wr = jnp.pad(wr, wpad)
        wi = jnp.pad(wi, wpad)

    out_r, out_i = _compl_mul_modes_pallas(
        xr, xi, wr, wi, tm=tm, cin_blk=cin_blk, vmem_limit=vmem_limit)

    out_c = (out_r[:, :Cout, :M4] + 1j * out_i[:, :Cout, :M4]).astype(jnp.complex64)
    out_c = out_c.reshape(B, Cout, 4, m1, m2, m3)

    # Scatter the 4 corner blocks into the (otherwise zero) output spectrum.
    out_ft = jnp.zeros((B, Cout, S1, S2, S3 // 2 + 1), dtype=jnp.complex64)
    out_ft = out_ft.at[:, :, :m1, :m2, :m3].set(out_c[:, :, 0])
    out_ft = out_ft.at[:, :, -m1:, :m2, :m3].set(out_c[:, :, 1])
    out_ft = out_ft.at[:, :, :m1, -m2:, :m3].set(out_c[:, :, 2])
    out_ft = out_ft.at[:, :, -m1:, -m2:, :m3].set(out_c[:, :, 3])

    # Inverse real FFT back to physical space.
    return jnp.fft.irfftn(out_ft, s=(S1, S2, S3), axes=(-3, -2, -1))


# ---------------------------------------------------------------------------
# Pure-JAX reference (mirrors the PyTorch forward) + demo
# ---------------------------------------------------------------------------
def _reference(x, w1, w2, w3, w4, m1, m2, m3):
    B, Cin, S1, S2, S3 = x.shape
    Cout = w1.shape[1]
    x_ft = jnp.fft.rfftn(x, axes=(-3, -2, -1))
    cm = lambda a, w: jnp.einsum("bixyz,ioxyz->boxyz", a, w)
    out_ft = jnp.zeros((B, Cout, S1, S2, S3 // 2 + 1), dtype=jnp.complex64)
    out_ft = out_ft.at[:, :, :m1, :m2, :m3].set(cm(x_ft[:, :, :m1, :m2, :m3], w1))
    out_ft = out_ft.at[:, :, -m1:, :m2, :m3].set(cm(x_ft[:, :, -m1:, :m2, :m3], w2))
    out_ft = out_ft.at[:, :, :m1, -m2:, :m3].set(cm(x_ft[:, :, :m1, -m2:, :m3], w3))
    out_ft = out_ft.at[:, :, -m1:, -m2:, :m3].set(cm(x_ft[:, :, -m1:, -m2:, :m3], w4))
    return jnp.fft.irfftn(out_ft, s=(S1, S2, S3), axes=(-3, -2, -1))


if __name__ == "__main__":
    # Small, module-consistent shapes (PyTorch layout: B, Cin, S1, S2, S3).
    B, Cin, Cout = 2, 4, 4
    S1 = S2 = S3 = 16
    m1 = m2 = m3 = 4

    key = jax.random.PRNGKey(0)
    kx, k1r, k1i, k2r, k2i, k3r, k3i, k4r, k4i = jax.random.split(key, 9)

    x = jax.random.normal(kx, (B, Cin, S1, S2, S3), dtype=jnp.float32)

    scale = 1.0 / (Cin * Cout)
    wshape = (Cin, Cout, m1, m2, m3)

    def make_w(kr, ki):
        # matches torch.rand(..., dtype=cfloat): uniform [0,1) real & imag
        return (scale * (jax.random.uniform(kr, wshape)
                         + 1j * jax.random.uniform(ki, wshape))).astype(jnp.complex64)

    w1 = make_w(k1r, k1i)
    w2 = make_w(k2r, k2i)
    w3 = make_w(k3r, k3i)
    w4 = make_w(k4r, k4i)

    ref = jax.block_until_ready(_reference(x, w1, w2, w3, w4, m1, m2, m3))

    # f32-streamed kernel path (tight tolerance vs. the reference).
    out = spectral_conv3d(x, w1, w2, w3, w4,
                          modes1=m1, modes2=m2, modes3=m3,
                          stream_dtype=jnp.float32)
    out = jax.block_until_ready(out)
    assert out.shape == (B, Cout, S1, S2, S3)
    assert jnp.allclose(out, ref, atol=2e-4, rtol=2e-4), "f32 path mismatch"

    # Generation-preferred streaming dtype (bf16 on v6e/v7x, f32 elsewhere).
    sdt = preferred_stream_dtype()
    out2 = spectral_conv3d(x, w1, w2, w3, w4,
                           modes1=m1, modes2=m2, modes3=m3, stream_dtype=sdt)
    out2 = jax.block_until_ready(out2)
    assert out2.shape == (B, Cout, S1, S2, S3)
    tol = 5e-2 if sdt == jnp.bfloat16 else 2e-4
    assert jnp.allclose(out2, ref, atol=tol, rtol=tol), "streamed path mismatch"

    print("KERNEL_OK")
</pallas_src>

<mosaic_0001>
module attributes {stable_mosaic.version = 11 : i64} {
  func.func @_spectral_mul_kernel(%arg0: i32, %arg1: i32, %arg2: memref<4x2x128xf32, #tpu.memory_space<vmem>>, %arg3: memref<4x2x128xf32, #tpu.memory_space<vmem>>, %arg4: memref<4x8x128xf32, #tpu.memory_space<vmem>>, %arg5: memref<4x8x128xf32, #tpu.memory_space<vmem>>, %arg6: memref<2x8x128xf32, #tpu.memory_space<vmem>>, %arg7: memref<2x8x128xf32, #tpu.memory_space<vmem>>) attributes {dimension_semantics = [#tpu.dimension_semantics<parallel>, #tpu.dimension_semantics<arbitrary>], iteration_bounds = array<i64: 2, 1>, scalar_prefetch = 0 : i64, scratch_operands = 0 : i64, tpu.core_type = #tpu.core_type<tc>, window_params = [{transform_indices = @transform_0, window_bounds = array<i64: 4, 2, 128>}, {transform_indices = @transform_1, window_bounds = array<i64: 4, 2, 128>}, {transform_indices = @transform_2, window_bounds = array<i64: 4, 8, 128>}, {transform_indices = @transform_3, window_bounds = array<i64: 4, 8, 128>}, {transform_indices = @transform_4, window_bounds = array<i64: 2, 8, 128>}, {transform_indices = @transform_5, window_bounds = array<i64: 2, 8, 128>}]} {
    %c0_i32 = arith.constant 0 : i32
    %0 = arith.cmpi eq, %arg1, %c0_i32 : i32
    %1 = arith.extui %0 : i1 to i32
    %c0_i32_0 = arith.constant 0 : i32
    %2 = arith.cmpi ne, %1, %c0_i32_0 : i32
    scf.if %2 {
      %cst = arith.constant 0.000000e+00 : f32
      %259 = vector.broadcast %cst : f32 to vector<2x8x128xf32>
      %c0_58 = arith.constant 0 : index
      %c0_59 = arith.constant 0 : index
      %c0_60 = arith.constant 0 : index
      %260 = vector.load %arg6[%c0_58, %c0_59, %c0_60] : memref<2x8x128xf32, #tpu.memory_space<vmem>>, vector<2x8x128xf32>
      tpu.vector_store %arg6[%c0_58, %c0_59, %c0_60], %259 {strides = array<i32>} : memref<2x8x128xf32, #tpu.memory_space<vmem>>, vector<2x8x128xf32>,
      %cst_61 = arith.constant 0.000000e+00 : f32
      %261 = vector.broadcast %cst_61 : f32 to vector<2x8x128xf32>
      %c0_62 = arith.constant 0 : index
      %c0_63 = arith.constant 0 : index
      %c0_64 = arith.constant 0 : index
      %262 = vector.load %arg7[%c0_62, %c0_63, %c0_64] : memref<2x8x128xf32, #tpu.memory_space<vmem>>, vector<2x8x128xf32>
      tpu.vector_store %arg7[%c0_62, %c0_63, %c0_64], %261 {strides = array<i32>} : memref<2x8x128xf32, #tpu.memory_space<vmem>>, vector<2x8x128xf32>,
    } else {
    }
    %c0_i32_1 = arith.constant 0 : i32
    %c128_i32 = arith.constant 128 : i32
    %3 = arith.muli %c0_i32_1, %c128_i32 : i32
    %4 = tpu.assume_multiple %3, 128 : i32
    %c0 = arith.constant 0 : index
    %c0_2 = arith.constant 0 : index
    %5 = arith.index_cast %4 : i32 to index
    %6 = vector.load %arg6[%c0, %c0_2, %5] : memref<2x8x128xf32, #tpu.memory_space<vmem>>, vector<1x8x128xf32>
    %7 = vector.shape_cast %6 : vector<1x8x128xf32> to vector<8x128xf32>
    %c0_3 = arith.constant 0 : index
    %c0_4 = arith.constant 0 : index
    %8 = arith.index_cast %4 : i32 to index
    %9 = vector.load %arg7[%c0_3, %c0_4, %8] : memref<2x8x128xf32, #tpu.memory_space<vmem>>, vector<1x8x128xf32>
    %10 = vector.shape_cast %9 : vector<1x8x128xf32> to vector<8x128xf32>
    %c0_i32_5 = arith.constant 0 : i32
    %11 = arith.index_cast %c0_i32_5 : i32 to index
    %c0_6 = arith.constant 0 : index
    %12 = arith.index_cast %4 : i32 to index
    %13 = vector.load %arg2[%11, %c0_6, %12] : memref<4x2x128xf32, #tpu.memory_space<vmem>>, vector<1x1x128xf32>
    %14 = vector.shape_cast %13 : vector<1x1x128xf32> to vector<1x128xf32>
    %15 = arith.index_cast %c0_i32_5 : i32 to index
    %c0_7 = arith.constant 0 : index
    %16 = arith.index_cast %4 : i32 to index
    %17 = vector.load %arg3[%15, %c0_7, %16] : memref<4x2x128xf32, #tpu.memory_space<vmem>>, vector<1x1x128xf32>
    %18 = vector.shape_cast %17 : vector<1x1x128xf32> to vector<1x128xf32>
    %19 = arith.index_cast %c0_i32_5 : i32 to index
    %c0_8 = arith.constant 0 : index
    %20 = arith.index_cast %4 : i32 to index
    %21 = vector.load %arg4[%19, %c0_8, %20] : memref<4x8x128xf32, #tpu.memory_space<vmem>>, vector<1x8x128xf32>
    %22 = vector.shape_cast %21 : vector<1x8x128xf32> to vector<8x128xf32>
    %23 = arith.index_cast %c0_i32_5 : i32 to index
    %c0_9 = arith.constant 0 : index
    %24 = arith.index_cast %4 : i32 to index
    %25 = vector.load %arg5[%23, %c0_9, %24] : memref<4x8x128xf32, #tpu.memory_space<vmem>>, vector<1x8x128xf32>
    %26 = vector.shape_cast %25 : vector<1x8x128xf32> to vector<8x128xf32>
    %27 = vector.broadcast %14 : vector<1x128xf32> to vector<8x128xf32>
    %28 = arith.mulf %27, %22 : vector<8x128xf32>
    %29 = vector.broadcast %18 : vector<1x128xf32> to vector<8x128xf32>
    %30 = arith.mulf %29, %26 : vector<8x128xf32>
    %31 = arith.subf %28, %30 : vector<8x128xf32>
    %32 = arith.addf %7, %31 : vector<8x128xf32>
    %33 = vector.broadcast %14 : vector<1x128xf32> to vector<8x128xf32>
    %34 = arith.mulf %33, %26 : vector<8x128xf32>
    %35 = vector.broadcast %18 : vector<1x128xf32> to vector<8x128xf32>
    %36 = arith.mulf %35, %22 : vector<8x128xf32>
    %37 = arith.addf %34, %36 : vector<8x128xf32>
    %38 = arith.addf %10, %37 : vector<8x128xf32>
    %c1_i32 = arith.constant 1 : i32
    %39 = arith.index_cast %c1_i32 : i32 to index
    %c0_10 = arith.constant 0 : index
    %40 = arith.index_cast %4 : i32 to index
    %41 = vector.load %arg2[%39, %c0_10, %40] : memref<4x2x128xf32, #tpu.memory_space<vmem>>, vector<1x1x128xf32>
    %42 = vector.shape_cast %41 : vector<1x1x128xf32> to vector<1x128xf32>
    %43 = arith.index_cast %c1_i32 : i32 to index
    %c0_11 = arith.constant 0 : index
    %44 = arith.index_cast %4 : i32 to index
    %45 = vector.load %arg3[%43, %c0_11, %44] : memref<4x2x128xf32, #tpu.memory_space<vmem>>, vector<1x1x128xf32>
    %46 = vector.shape_cast %45 : vector<1x1x128xf32> to vector<1x128xf32>
    %47 = arith.index_cast %c1_i32 : i32 to index
    %c0_12 = arith.constant 0 : index
    %48 = arith.index_cast %4 : i32 to index
    %49 = vector.load %arg4[%47, %c0_12, %48] : memref<4x8x128xf32, #tpu.memory_space<vmem>>, vector<1x8x128xf32>
    %50 = vector.shape_cast %49 : vector<1x8x128xf32> to vector<8x128xf32>
    %51 = arith.index_cast %c1_i32 : i32 to index
    %c0_13 = arith.constant 0 : index
    %52 = arith.index_cast %4 : i32 to index
    %53 = vector.load %arg5[%51, %c0_13, %52] : memref<4x8x128xf32, #tpu.memory_space<vmem>>, vector<1x8x128xf32>
    %54 = vector.shape_cast %53 : vector<1x8x128xf32> to vector<8x128xf32>
    %55 = vector.broadcast %42 : vector<1x128xf32> to vector<8x128xf32>
    %56 = arith.mulf %55, %50 : vector<8x128xf32>
    %57 = vector.broadcast %46 : vector<1x128xf32> to vector<8x128xf32>
    %58 = arith.mulf %57, %54 : vector<8x128xf32>
    %59 = arith.subf %56, %58 : vector<8x128xf32>
    %60 = arith.addf %32, %59 : vector<8x128xf32>
    %61 = vector.broadcast %42 : vector<1x128xf32> to vector<8x128xf32>
    %62 = arith.mulf %61, %54 : vector<8x128xf32>
    %63 = vector.broadcast %46 : vector<1x128xf32> to vector<8x128xf32>
    %64 = arith.mulf %63, %50 : vector<8x128xf32>
    %65 = arith.addf %62, %64 : vector<8x128xf32>
    %66 = arith.addf %38, %65 : vector<8x128xf32>
    %c2_i32 = arith.constant 2 : i32
    %67 = arith.index_cast %c2_i32 : i32 to index
    %c0_14 = arith.constant 0 : index
    %68 = arith.index_cast %4 : i32 to index
    %69 = vector.load %arg2[%67, %c0_14, %68] : memref<4x2x128xf32, #tpu.memory_space<vmem>>, vector<1x1x128xf32>
    %70 = vector.shape_cast %69 : vector<1x1x128xf32> to vector<1x128xf32>
    %71 = arith.index_cast %c2_i32 : i32 to index
    %c0_15 = arith.constant 0 : index
    %72 = arith.index_cast %4 : i32 to index
    %73 = vector.load %arg3[%71, %c0_15, %72] : memref<4x2x128xf32, #tpu.memory_space<vmem>>, vector<1x1x128xf32>
    %74 = vector.shape_cast %73 : vector<1x1x128xf32> to vector<1x128xf32>
    %75 = arith.index_cast %c2_i32 : i32 to index
    %c0_16 = arith.constant 0 : index
    %76 = arith.index_cast %4 : i32 to index
    %77 = vector.load %arg4[%75, %c0_16, %76] : memref<4x8x128xf32, #tpu.memory_space<vmem>>, vector<1x8x128xf32>
    %78 = vector.shape_cast %77 : vector<1x8x128xf32> to vector<8x128xf32>
    %79 = arith.index_cast %c2_i32 : i32 to index
    %c0_17 = arith.constant 0 : index
    %80 = arith.index_cast %4 : i32 to index
    %81 = vector.load %arg5[%79, %c0_17, %80] : memref<4x8x128xf32, #tpu.memory_space<vmem>>, vector<1x8x128xf32>
    %82 = vector.shape_cast %81 : vector<1x8x128xf32> to vector<8x128xf32>
    %83 = vector.broadcast %70 : vector<1x128xf32> to vector<8x128xf32>
    %84 = arith.mulf %83, %78 : vector<8x128xf32>
    %85 = vector.broadcast %74 : vector<1x128xf32> to vector<8x128xf32>
    %86 = arith.mulf %85, %82 : vector<8x128xf32>
    %87 = arith.subf %84, %86 : vector<8x128xf32>
    %88 = arith.addf %60, %87 : vector<8x128xf32>
    %89 = vector.broadcast %70 : vector<1x128xf32> to vector<8x128xf32>
    %90 = arith.mulf %89, %82 : vector<8x128xf32>
    %91 = vector.broadcast %74 : vector<1x128xf32> to vector<8x128xf32>
    %92 = arith.mulf %91, %78 : vector<8x128xf32>
    %93 = arith.addf %90, %92 : vector<8x128xf32>
    %94 = arith.addf %66, %93 : vector<8x128xf32>
    %c3_i32 = arith.constant 3 : i32
    %95 = arith.index_cast %c3_i32 : i32 to index
    %c0_18 = arith.constant 0 : index
    %96 = arith.index_cast %4 : i32 to index
    %97 = vector.load %arg2[%95, %c0_18, %96] : memref<4x2x128xf32, #tpu.memory_space<vmem>>, vector<1x1x128xf32>
    %98 = vector.shape_cast %97 : vector<1x1x128xf32> to vector<1x128xf32>
    %99 = arith.index_cast %c3_i32 : i32 to index
    %c0_19 = arith.constant 0 : index
    %100 = arith.index_cast %4 : i32 to index
    %101 = vector.load %arg3[%99, %c0_19, %100] : memref<4x2x128xf32, #tpu.memory_space<vmem>>, vector<1x1x128xf32>
    %102 = vector.shape_cast %101 : vector<1x1x128xf32> to vector<1x128xf32>
    %103 = arith.index_cast %c3_i32 : i32 to index
    %c0_20 = arith.constant 0 : index
    %104 = arith.index_cast %4 : i32 to index
    %105 = vector.load %arg4[%103, %c0_20, %104] : memref<4x8x128xf32, #tpu.memory_space<vmem>>, vector<1x8x128xf32>
    %106 = vector.shape_cast %105 : vector<1x8x128xf32> to vector<8x128xf32>
    %107 = arith.index_cast %c3_i32 : i32 to index
    %c0_21 = arith.constant 0 : index
    %108 = arith.index_cast %4 : i32 to index
    %109 = vector.load %arg5[%107, %c0_21, %108] : memref<4x8x128xf32, #tpu.memory_space<vmem>>, vector<1x8x128xf32>
    %110 = vector.shape_cast %109 : vector<1x8x128xf32> to vector<8x128xf32>
    %111 = vector.broadcast %98 : vector<1x128xf32> to vector<8x128xf32>
    %112 = arith.mulf %111, %106 : vector<8x128xf32>
    %113 = vector.broadcast %102 : vector<1x128xf32> to vector<8x128xf32>
    %114 = arith.mulf %113, %110 : vector<8x128xf32>
    %115 = arith.subf %112, %114 : vector<8x128xf32>
    %116 = arith.addf %88, %115 : vector<8x128xf32>
    %117 = vector.broadcast %98 : vector<1x128xf32> to vector<8x128xf32>
    %118 = arith.mulf %117, %110 : vector<8x128xf32>
    %119 = vector.broadcast %102 : vector<1x128xf32> to vector<8x128xf32>
    %120 = arith.mulf %119, %106 : vector<8x128xf32>
    %121 = arith.addf %118, %120 : vector<8x128xf32>
    %122 = arith.addf %94, %121 : vector<8x128xf32>
    %c4_i32 = arith.constant 4 : i32
    %c0_22 = arith.constant 0 : index
    %c0_23 = arith.constant 0 : index
    %123 = arith.index_cast %4 : i32 to index
    %124 = vector.load %arg6[%c0_22, %c0_23, %123] : memref<2x8x128xf32, #tpu.memory_space<vmem>>, vector<1x8x128xf32>
    %125 = vector.shape_cast %124 : vector<1x8x128xf32> to vector<8x128xf32>
    %126 = vector.shape_cast %116 : vector<8x128xf32> to vector<1x8x128xf32>
    tpu.vector_store %arg6[%c0_22, %c0_23, %123], %126 {strides = array<i32>} : memref<2x8x128xf32, #tpu.memory_space<vmem>>, vector<1x8x128xf32>,
    %c0_24 = arith.constant 0 : index
    %c0_25 = arith.constant 0 : index
    %127 = arith.index_cast %4 : i32 to index
    %128 = vector.load %arg7[%c0_24, %c0_25, %127] : memref<2x8x128xf32, #tpu.memory_space<vmem>>, vector<1x8x128xf32>
    %129 = vector.shape_cast %128 : vector<1x8x128xf32> to vector<8x128xf32>
    %130 = vector.shape_cast %122 : vector<8x128xf32> to vector<1x8x128xf32>
    tpu.vector_store %arg7[%c0_24, %c0_25, %127], %130 {strides = array<i32>} : memref<2x8x128xf32, #tpu.memory_space<vmem>>, vector<1x8x128xf32>,
    %c1_i32_26 = arith.constant 1 : i32
    %c0_i32_27 = arith.constant 0 : i32
    %c128_i32_28 = arith.constant 128 : i32
    %131 = arith.muli %c0_i32_27, %c128_i32_28 : i32
    %132 = tpu.assume_multiple %131, 128 : i32
    %c1 = arith.constant 1 : index
    %c0_29 = arith.constant 0 : index
    %133 = arith.index_cast %132 : i32 to index
    %134 = vector.load %arg6[%c1, %c0_29, %133] : memref<2x8x128xf32, #tpu.memory_space<vmem>>, vector<1x8x128xf32>
    %135 = vector.shape_cast %134 : vector<1x8x128xf32> to vector<8x128xf32>
    %c1_30 = arith.constant 1 : index
    %c0_31 = arith.constant 0 : index
    %136 = arith.index_cast %132 : i32 to index
    %137 = vector.load %arg7[%c1_30, %c0_31, %136] : memref<2x8x128xf32, #tpu.memory_space<vmem>>, vector<1x8x128xf32>
    %138 = vector.shape_cast %137 : vector<1x8x128xf32> to vector<8x128xf32>
    %c0_i32_32 = arith.constant 0 : i32
    %139 = arith.index_cast %c0_i32_32 : i32 to index
    %c1_33 = arith.constant 1 : index
    %140 = arith.index_cast %132 : i32 to index
    %141 = vector.load %arg2[%139, %c1_33, %140] : memref<4x2x128xf32, #tpu.memory_space<vmem>>, vector<1x1x128xf32>
    %142 = vector.shape_cast %141 : vector<1x1x128xf32> to vector<1x128xf32>
    %143 = arith.index_cast %c0_i32_32 : i32 to index
    %c1_34 = arith.constant 1 : index
    %144 = arith.index_cast %132 : i32 to index
    %145 = vector.load %arg3[%143, %c1_34, %144] : memref<4x2x128xf32, #tpu.memory_space<vmem>>, vector<1x1x128xf32>
    %146 = vector.shape_cast %145 : vector<1x1x128xf32> to vector<1x128xf32>
    %147 = arith.index_cast %c0_i32_32 : i32 to index
    %c0_35 = arith.constant 0 : index
    %148 = arith.index_cast %132 : i32 to index
    %149 = vector.load %arg4[%147, %c0_35, %148] : memref<4x8x128xf32, #tpu.memory_space<vmem>>, vector<1x8x128xf32>
    %150 = vector.shape_cast %149 : vector<1x8x128xf32> to vector<8x128xf32>
    %151 = arith.index_cast %c0_i32_32 : i32 to index
    %c0_36 = arith.constant 0 : index
    %152 = arith.index_cast %132 : i32 to index
    %153 = vector.load %arg5[%151, %c0_36, %152] : memref<4x8x128xf32, #tpu.memory_space<vmem>>, vector<1x8x128xf32>
    %154 = vector.shape_cast %153 : vector<1x8x128xf32> to vector<8x128xf32>
    %155 = vector.broadcast %142 : vector<1x128xf32> to vector<8x128xf32>
    %156 = arith.mulf %155, %150 : vector<8x128xf32>
    %157 = vector.broadcast %146 : vector<1x128xf32> to vector<8x128xf32>
    %158 = arith.mulf %157, %154 : vector<8x128xf32>
    %159 = arith.subf %156, %158 : vector<8x128xf32>
    %160 = arith.addf %135, %159 : vector<8x128xf32>
    %161 = vector.broadcast %142 : vector<1x128xf32> to vector<8x128xf32>
    %162 = arith.mulf %161, %154 : vector<8x128xf32>
    %163 = vector.broadcast %146 : vector<1x128xf32> to vector<8x128xf32>
    %164 = arith.mulf %163, %150 : vector<8x128xf32>
    %165 = arith.addf %162, %164 : vector<8x128xf32>
    %166 = arith.addf %138, %165 : vector<8x128xf32>
    %c1_i32_37 = arith.constant 1 : i32
    %167 = arith.index_cast %c1_i32_37 : i32 to index
    %c1_38 = arith.constant 1 : index
    %168 = arith.index_cast %132 : i32 to index
    %169 = vector.load %arg2[%167, %c1_38, %168] : memref<4x2x128xf32, #tpu.memory_space<vmem>>, vector<1x1x128xf32>
    %170 = vector.shape_cast %169 : vector<1x1x128xf32> to vector<1x128xf32>
    %171 = arith.index_cast %c1_i32_37 : i32 to index
    %c1_39 = arith.constant 1 : index
    %172 = arith.index_cast %132 : i32 to index
    %173 = vector.load %arg3[%171, %c1_39, %172] : memref<4x2x128xf32, #tpu.memory_space<vmem>>, vector<1x1x128xf32>
    %174 = vector.shape_cast %173 : vector<1x1x128xf32> to vector<1x128xf32>
    %175 = arith.index_cast %c1_i32_37 : i32 to index
    %c0_40 = arith.constant 0 : index
    %176 = arith.index_cast %132 : i32 to index
    %177 = vector.load %arg4[%175, %c0_40, %176] : memref<4x8x128xf32, #tpu.memory_space<vmem>>, vector<1x8x128xf32>
    %178 = vector.shape_cast %177 : vector<1x8x128xf32> to vector<8x128xf32>
    %179 = arith.index_cast %c1_i32_37 : i32 to index
    %c0_41 = arith.constant 0 : index
    %180 = arith.index_cast %132 : i32 to index
    %181 = vector.load %arg5[%179, %c0_41, %180] : memref<4x8x128xf32, #tpu.memory_space<vmem>>, vector<1x8x128xf32>
    %182 = vector.shape_cast %181 : vector<1x8x128xf32> to vector<8x128xf32>
    %183 = vector.broadcast %170 : vector<1x128xf32> to vector<8x128xf32>
    %184 = arith.mulf %183, %178 : vector<8x128xf32>
    %185 = vector.broadcast %174 : vector<1x128xf32> to vector<8x128xf32>
    %186 = arith.mulf %185, %182 : vector<8x128xf32>
    %187 = arith.subf %184, %186 : vector<8x128xf32>
    %188 = arith.addf %160, %187 : vector<8x128xf32>
    %189 = vector.broadcast %170 : vector<1x128xf32> to vector<8x128xf32>
    %190 = arith.mulf %189, %182 : vector<8x128xf32>
    %191 = vector.broadcast %174 : vector<1x128xf32> to vector<8x128xf32>
    %192 = arith.mulf %191, %178 : vector<8x128xf32>
    %193 = arith.addf %190, %192 : vector<8x128xf32>
    %194 = arith.addf %166, %193 : vector<8x128xf32>
    %c2_i32_42 = arith.constant 2 : i32
    %195 = arith.index_cast %c2_i32_42 : i32 to index
    %c1_43 = arith.constant 1 : index
    %196 = arith.index_cast %132 : i32 to index
    %197 = vector.load %arg2[%195, %c1_43, %196] : memref<4x2x128xf32, #tpu.memory_space<vmem>>, vector<1x1x128xf32>
    %198 = vector.shape_cast %197 : vector<1x1x128xf32> to vector<1x128xf32>
    %199 = arith.index_cast %c2_i32_42 : i32 to index
    %c1_44 = arith.constant 1 : index
    %200 = arith.index_cast %132 : i32 to index
    %201 = vector.load %arg3[%199, %c1_44, %200] : memref<4x2x128xf32, #tpu.memory_space<vmem>>, vector<1x1x128xf32>
    %202 = vector.shape_cast %201 : vector<1x1x128xf32> to vector<1x128xf32>
    %203 = arith.index_cast %c2_i32_42 : i32 to index
    %c0_45 = arith.constant 0 : index
    %204 = arith.index_cast %132 : i32 to index
    %205 = vector.load %arg4[%203, %c0_45, %204] : memref<4x8x128xf32, #tpu.memory_space<vmem>>, vector<1x8x128xf32>
    %206 = vector.shape_cast %205 : vector<1x8x128xf32> to vector<8x128xf32>
    %207 = arith.index_cast %c2_i32_42 : i32 to index
    %c0_46 = arith.constant 0 : index
    %208 = arith.index_cast %132 : i32 to index
    %209 = vector.load %arg5[%207, %c0_46, %208] : memref<4x8x128xf32, #tpu.memory_space<vmem>>, vector<1x8x128xf32>
    %210 = vector.shape_cast %209 : vector<1x8x128xf32> to vector<8x128xf32>
    %211 = vector.broadcast %198 : vector<1x128xf32> to vector<8x128xf32>
    %212 = arith.mulf %211, %206 : vector<8x128xf32>
    %213 = vector.broadcast %202 : vector<1x128xf32> to vector<8x128xf32>
    %214 = arith.mulf %213, %210 : vector<8x128xf32>
    %215 = arith.subf %212, %214 : vector<8x128xf32>
    %216 = arith.addf %188, %215 : vector<8x128xf32>
    %217 = vector.broadcast %198 : vector<1x128xf32> to vector<8x128xf32>
    %218 = arith.mulf %217, %210 : vector<8x128xf32>
    %219 = vector.broadcast %202 : vector<1x128xf32> to vector<8x128xf32>
    %220 = arith.mulf %219, %206 : vector<8x128xf32>
    %221 = arith.addf %218, %220 : vector<8x128xf32>
    %222 = arith.addf %194, %221 : vector<8x128xf32>
    %c3_i32_47 = arith.constant 3 : i32
    %223 = arith.index_cast %c3_i32_47 : i32 to index
    %c1_48 = arith.constant 1 : index
    %224 = arith.index_cast %132 : i32 to index
    %225 = vector.load %arg2[%223, %c1_48, %224] : memref<4x2x128xf32, #tpu.memory_space<vmem>>, vector<1x1x128xf32>
    %226 = vector.shape_cast %225 : vector<1x1x128xf32> to vector<1x128xf32>
    %227 = arith.index_cast %c3_i32_47 : i32 to index
    %c1_49 = arith.constant 1 : index
    %228 = arith.index_cast %132 : i32 to index
    %229 = vector.load %arg3[%227, %c1_49, %228] : memref<4x2x128xf32, #tpu.memory_space<vmem>>, vector<1x1x128xf32>
    %230 = vector.shape_cast %229 : vector<1x1x128xf32> to vector<1x128xf32>
    %231 = arith.index_cast %c3_i32_47 : i32 to index
    %c0_50 = arith.constant 0 : index
    %232 = arith.index_cast %132 : i32 to index
    %233 = vector.load %arg4[%231, %c0_50, %232] : memref<4x8x128xf32, #tpu.memory_space<vmem>>, vector<1x8x128xf32>
    %234 = vector.shape_cast %233 : vector<1x8x128xf32> to vector<8x128xf32>
    %235 = arith.index_cast %c3_i32_47 : i32 to index
    %c0_51 = arith.constant 0 : index
    %236 = arith.index_cast %132 : i32 to index
    %237 = vector.load %arg5[%235, %c0_51, %236] : memref<4x8x128xf32, #tpu.memory_space<vmem>>, vector<1x8x128xf32>
    %238 = vector.shape_cast %237 : vector<1x8x128xf32> to vector<8x128xf32>
    %239 = vector.broadcast %226 : vector<1x128xf32> to vector<8x128xf32>
    %240 = arith.mulf %239, %234 : vector<8x128xf32>
    %241 = vector.broadcast %230 : vector<1x128xf32> to vector<8x128xf32>
    %242 = arith.mulf %241, %238 : vector<8x128xf32>
    %243 = arith.subf %240, %242 : vector<8x128xf32>
    %244 = arith.addf %216, %243 : vector<8x128xf32>
    %245 = vector.broadcast %226 : vector<1x128xf32> to vector<8x128xf32>
    %246 = arith.mulf %245, %238 : vector<8x128xf32>
    %247 = vector.broadcast %230 : vector<1x128xf32> to vector<8x128xf32>
    %248 = arith.mulf %247, %234 : vector<8x128xf32>
    %249 = arith.addf %246, %248 : vector<8x128xf32>
    %250 = arith.addf %222, %249 : vector<8x128xf32>
    %c4_i32_52 = arith.constant 4 : i32
    %c1_53 = arith.constant 1 : index
    %c0_54 = arith.constant 0 : index
    %251 = arith.index_cast %132 : i32 to index
    %252 = vector.load %arg6[%c1_53, %c0_54, %251] : memref<2x8x128xf32, #tpu.memory_space<vmem>>, vector<1x8x128xf32>
    %253 = vector.shape_cast %252 : vector<1x8x128xf32> to vector<8x128xf32>
    %254 = vector.shape_cast %244 : vector<8x128xf32> to vector<1x8x128xf32>
    tpu.vector_store %arg6[%c1_53, %c0_54, %251], %254 {strides = array<i32>} : memref<2x8x128xf32, #tpu.memory_space<vmem>>, vector<1x8x128xf32>,
    %c1_55 = arith.constant 1 : index
    %c0_56 = arith.constant 0 : index
    %255 = arith.index_cast %132 : i32 to index
    %256 = vector.load %arg7[%c1_55, %c0_56, %255] : memref<2x8x128xf32, #tpu.memory_space<vmem>>, vector<1x8x128xf32>
    %257 = vector.shape_cast %256 : vector<1x8x128xf32> to vector<8x128xf32>
    %258 = vector.shape_cast %250 : vector<8x128xf32> to vector<1x8x128xf32>
    tpu.vector_store %arg7[%c1_55, %c0_56, %255], %258 {strides = array<i32>} : memref<2x8x128xf32, #tpu.memory_space<vmem>>, vector<1x8x128xf32>,
    %c1_i32_57 = arith.constant 1 : i32
    return
  }
  func.func @transform_0(%arg0: i32, %arg1: i32) -> (i32, i32, i32) {
    %c0_i32 = arith.constant 0 : i32
    %c0_i32_0 = arith.constant 0 : i32
    return %arg1, %c0_i32, %arg0 : i32, i32, i32
  }
  func.func @transform_1(%arg0: i32, %arg1: i32) -> (i32, i32, i32) {
    %c0_i32 = arith.constant 0 : i32
    %c0_i32_0 = arith.constant 0 : i32
    return %arg1, %c0_i32, %arg0 : i32, i32, i32
  }
  func.func @transform_2(%arg0: i32, %arg1: i32) -> (i32, i32, i32) {
    %c0_i32 = arith.constant 0 : i32
    %c0_i32_0 = arith.constant 0 : i32
    return %arg1, %c0_i32, %arg0 : i32, i32, i32
  }
  func.func @transform_3(%arg0: i32, %arg1: i32) -> (i32, i32, i32) {
    %c0_i32 = arith.constant 0 : i32
    %c0_i32_0 = arith.constant 0 : i32
    return %arg1, %c0_i32, %arg0 : i32, i32, i32
  }
  func.func @transform_4(%arg0: i32, %arg1: i32) -> (i32, i32, i32) {
    %c0_i32 = arith.constant 0 : i32
    %c0_i32_0 = arith.constant 0 : i32
    %c0_i32_1 = arith.constant 0 : i32
    return %c0_i32, %c0_i32_0, %arg0 : i32, i32, i32
  }
  func.func @transform_5(%arg0: i32, %arg1: i32) -> (i32, i32, i32) {
    %c0_i32 = arith.constant 0 : i32
    %c0_i32_0 = arith.constant 0 : i32
    %c0_i32_1 = arith.constant 0 : i32
    return %c0_i32, %c0_i32_0, %arg0 : i32, i32, i32
  }
}

</mosaic_0001>

<llo_original>
// kernel: custom-call
$region0: #{custom-call}
  %s0 = inlined_call_operand.hbm [shape: c64[4,4,4,4,4], index: 0, kind: input, shape index: {}]
  %s1 = inlined_call_operand.vmem [shape: f32[4,4,4,4,4], index: 1, kind: output, shape index: {}]
  $region1: #{custom-call} parent=0
    #allocation0 [shape = 's32[1]{0}', space=sflag, size = 0x4, scoped, tag = 'scoped memory for custom-call']
    %2 = vsyncpa [#allocation0], 0
    %s3 = sshll.u32 %s1, 4
    %s4 = int_to_ptr.vmem [resolvable:$true] %s3
    %6 = dma.hbm_to_vmem [thread:$0]  %s0, 4096, %s4, [#allocation0]
    %7 = dma.done [#allocation0], 4096
    %8 = vsyncpa [#allocation0], 1

// kernel: custom-call.1
$region0: #{custom-call.1}
  %s0 = inlined_call_operand.hbm [shape: c64[4,4,4,4,4], index: 0, kind: input, shape index: {}]
  %s1 = inlined_call_operand.vmem [shape: f32[4,4,4,4,4], index: 1, kind: output, shape index: {}]
  %s2 = scalar_lea.hbm %s0, 4096
  $region1: #{custom-call.1} parent=0
    #allocation0 [shape = 's32[1]{0}', space=sflag, size = 0x4, scoped, tag = 'scoped memory for custom-call.1']
    %3 = vsyncpa [#allocation0], 0
    %s4 = sshll.u32 %s1, 4
    %s5 = int_to_ptr.vmem [resolvable:$true] %s4
    %7 = dma.hbm_to_vmem [thread:$0]  %s2, 4096, %s5, [#allocation0]
    %8 = dma.done [#allocation0], 4096
    %9 = vsyncpa [#allocation0], 1

// kernel: spectral_conv3d.1
$region0: #{spectral_conv3d.1}
  #allocation0 [shape = 'u32[]', space=smem, size = 0x4, offset = 0x4, fixed_abs, tag = 'smem constant byte address 0x4 - core index']
  #allocation1 [shape = 'u32[144,128]{1,0:T(1,128)}', space=vmem, size = 0x12000, scoped, tag = 'internal scratch']
  %s0 = inlined_call_operand.vmem [shape: f32[4,2,256], index: 0, kind: input, shape index: {}]
  %s1 = inlined_call_operand.vmem [shape: f32[4,2,256], index: 1, kind: input, shape index: {}]
  %s2 = inlined_call_operand.vmem [shape: f32[4,8,256], index: 2, kind: input, shape index: {}]
  %s3 = inlined_call_operand.vmem [shape: f32[4,8,256], index: 3, kind: input, shape index: {}]
  %s4 = inlined_call_operand.vmem [shape: f32[2,8,256], index: 4, kind: output, shape index: {0}]
  %s5 = inlined_call_operand.vmem [shape: f32[2,8,256], index: 5, kind: output, shape index: {1}]
  %6 = xla_tuple %s4, %s5
  %s7 = sld [smem:[#allocation0]]
  $region287: #{spectral_conv3d.1} parent=0
    _
  %s9 = ssub.s32 1, %s7
  %s10 = scalar_select 0, %s9, %s7
  $region1: #{spectral_conv3d.1} parent=0
    #allocation2 [shape = 'u8[8192]{0}', space=vmem, size = 0x2000, scoped, tag = 'input window, operand 0']
    #allocation3 [shape = 'u8[8192]{0}', space=vmem, size = 0x2000, scoped, tag = 'input window, operand 1']
    #allocation4 [shape = 'u8[32768]{0}', space=vmem, size = 0x8000, scoped, tag = 'input window, operand 2']
    #allocation5 [shape = 'u8[32768]{0}', space=vmem, size = 0x8000, scoped, tag = 'input window, operand 3']
    #allocation6 [shape = 'u8[16384]{0}', space=vmem, size = 0x4000, scoped, tag = 'output window, operand 0']
    #allocation7 [shape = 'u8[16384]{0}', space=vmem, size = 0x4000, scoped, tag = 'output window, operand 1']
    loop: start=0, step=1, limit=4
    $region2: #{spectral_conv3d.1} parent=1 // loop_pre_header
      _
    $region3: #{spectral_conv3d.1} parent=1 // loop_header
      %s12 = sphi 0, %s16
      %p13 = scmp.ge.s32.totalorder %s12, 4
      %s19 = sphi 0, %s31
      %s20 = sphi 0, %s27
      %s21 = sphi 0, %s19
      %s22 = sphi 0, %s20
      %s23 = sphi 0, %s21
      %s24 = sphi 0, %s22
      %s36 = sphi 0, %s38
      %s39 = sphi 0, %s36
      %s40 = sphi 0, %s39
      %s56 = sphi 0, %s40
      %s64 = sphi 0, %s66
      %s67 = sphi 0, %s64
      %s68 = sphi 0, %s67
      %s84 = sphi 0, %s68
      %s92 = sphi 0, %s94
      %s95 = sphi 0, %s92
      %s96 = sphi 0, %s95
      %s112 = sphi 0, %s96
      %s120 = sphi 0, %s122
      %s123 = sphi 0, %s120
      %s124 = sphi 0, %s123
      %s140 = sphi 0, %s124
      %s146 = sphi 0, %s148
      %s149 = sphi 0, %s146
      %s150 = sphi 0, %s149
      %s166 = sphi 0, %s150
      %s172 = sphi 0, %s174
      %s175 = sphi 0, %s172
      %s176 = sphi 0, %s175
      %s192 = sphi 0, %s176
    $region4: #{spectral_conv3d.1} parent=1 // loop_header_branch
      %15 = sbr.rel (%p13) target = $region8
    $region5: #{spectral_conv3d.1} parent=1 // loop_body
      %s17 = ssub.s32 %s12, 1
      %s18 = ssub.s32 %s12, 2
      %s25 = sadd.s32 1, %s20
      %p26 = scmp.ge.s32.totalorder %s25, 1
      %s27 = scalar_select %p26, 0, %s25
      %s28 = sadd.s32 1, %s19
      %s29 = scalar_select %p26, %s28, %s19
      %p30 = scmp.ge.s32.totalorder %s29, 2
      %s31 = scalar_select %p30, 0, %s29
      %s32 = ssub.s32 %s20, %s27
      %s33 = ssub.s32 %s19, %s31
      %s34 = sor.u32 %s32, %s33
      %p35 = scmp.eq.s32.totalorder %s34, 0
      %s37 = sadd.s32 %s36, 1
      %s38 = scalar_select %p35, %s36, %s37
      %p41 = pneg %p35
      %p42 = scmp.eq.s32.totalorder %s12, 1
      %p43 = por %p41, %p42
      %p44 = scmp.ne.s32.totalorder %s36, %s39
      %p45 = scmp.eq.s32.totalorder %s12, 0
      %p46 = por %p44, %p45
      %p47 = scmp.ne.s32.totalorder %s36, %s39
      %p48 = scmp.eq.s32.totalorder %s17, 1
      %p49 = por %p47, %p48
      %p50 = scmp.ne.s32.totalorder %s39, %s40
      %p51 = scmp.eq.s32.totalorder %s17, 0
      %p52 = por %p50, %p51
      %p53 = scmp.ne.s32.totalorder %s39, %s40
      %p54 = scmp.eq.s32.totalorder %s18, 1
      %p55 = por %p53, %p54
      %p57 = scmp.ne.s32.totalorder %s40, %s56
      %p58 = scmp.eq.s32.totalorder %s18, 0
      %p59 = por %p57, %p58
      %s60 = ssub.s32 %s20, %s27
      %s61 = ssub.s32 %s19, %s31
      %s62 = sor.u32 %s60, %s61
      %p63 = scmp.eq.s32.totalorder %s62, 0
      %s65 = sadd.s32 %s64, 1
      %s66 = scalar_select %p63, %s64, %s65
      %p69 = pneg %p63
      %p70 = scmp.eq.s32.totalorder %s12, 1
      %p71 = por %p69, %p70
      %p72 = scmp.ne.s32.totalorder %s64, %s67
      %p73 = scmp.eq.s32.totalorder %s12, 0
      %p74 = por %p72, %p73
      %p75 = scmp.ne.s32.totalorder %s64, %s67
      %p76 = scmp.eq.s32.totalorder %s17, 1
      %p77 = por %p75, %p76
      %p78 = scmp.ne.s32.totalorder %s67, %s68
      %p79 = scmp.eq.s32.totalorder %s17, 0
      %p80 = por %p78, %p79
      %p81 = scmp.ne.s32.totalorder %s67, %s68
      %p82 = scmp.eq.s32.totalorder %s18, 1
      %p83 = por %p81, %p82
      %p85 = scmp.ne.s32.totalorder %s68, %s84
      %p86 = scmp.eq.s32.totalorder %s18, 0
      %p87 = por %p85, %p86
      %s88 = ssub.s32 %s20, %s27
      %s89 = ssub.s32 %s19, %s31
      %s90 = sor.u32 %s88, %s89
      %p91 = scmp.eq.s32.totalorder %s90, 0
      %s93 = sadd.s32 %s92, 1
      %s94 = scalar_select %p91, %s92, %s93
      %p97 = pneg %p91
      %p98 = scmp.eq.s32.totalorder %s12, 1
      %p99 = por %p97, %p98
      %p100 = scmp.ne.s32.totalorder %s92, %s95
      %p101 = scmp.eq.s32.totalorder %s12, 0
      %p102 = por %p100, %p101
      %p103 = scmp.ne.s32.totalorder %s92, %s95
      %p104 = scmp.eq.s32.totalorder %s17, 1
      %p105 = por %p103, %p104
      %p106 = scmp.ne.s32.totalorder %s95, %s96
      %p107 = scmp.eq.s32.totalorder %s17, 0
      %p108 = por %p106, %p107
      %p109 = scmp.ne.s32.totalorder %s95, %s96
      %p110 = scmp.eq.s32.totalorder %s18, 1
      %p111 = por %p109, %p110
      %p113 = scmp.ne.s32.totalorder %s96, %s112
      %p114 = scmp.eq.s32.totalorder %s18, 0
      %p115 = por %p113, %p114
      %s116 = ssub.s32 %s20, %s27
      %s117 = ssub.s32 %s19, %s31
      %s118 = sor.u32 %s116, %s117
      %p119 = scmp.eq.s32.totalorder %s118, 0
      %s121 = sadd.s32 %s120, 1
      %s122 = scalar_select %p119, %s120, %s121
      %p125 = pneg %p119
      %p126 = scmp.eq.s32.totalorder %s12, 1
      %p127 = por %p125, %p126
      %p128 = scmp.ne.s32.totalorder %s120, %s123
      %p129 = scmp.eq.s32.totalorder %s12, 0
      %p130 = por %p128, %p129
      %p131 = scmp.ne.s32.totalorder %s120, %s123
      %p132 = scmp.eq.s32.totalorder %s17, 1
      %p133 = por %p131, %p132
      %p134 = scmp.ne.s32.totalorder %s123, %s124
      %p135 = scmp.eq.s32.totalorder %s17, 0
      %p136 = por %p134, %p135
      %p137 = scmp.ne.s32.totalorder %s123, %s124
      %p138 = scmp.eq.s32.totalorder %s18, 1
      %p139 = por %p137, %p138
      %p141 = scmp.ne.s32.totalorder %s124, %s140
      %p142 = scmp.eq.s32.totalorder %s18, 0
      %p143 = por %p141, %p142
      %s144 = ssub.s32 %s19, %s31
      %p145 = scmp.eq.s32.totalorder %s144, 0
      %s147 = sadd.s32 %s146, 1
      %s148 = scalar_select %p145, %s146, %s147
      %p151 = pneg %p145
      %p152 = scmp.eq.s32.totalorder %s12, 1
      %p153 = por %p151, %p152
      %p154 = scmp.ne.s32.totalorder %s146, %s149
      %p155 = scmp.eq.s32.totalorder %s12, 0
      %p156 = por %p154, %p155
      %p157 = scmp.ne.s32.totalorder %s146, %s149
      %p158 = scmp.eq.s32.totalorder %s17, 1
      %p159 = por %p157, %p158
      %p160 = scmp.ne.s32.totalorder %s149, %s150
      %p161 = scmp.eq.s32.totalorder %s17, 0
      %p162 = por %p160, %p161
      %p163 = scmp.ne.s32.totalorder %s149, %s150
      %p164 = scmp.eq.s32.totalorder %s18, 1
      %p165 = por %p163, %p164
      %p167 = scmp.ne.s32.totalorder %s150, %s166
      %p168 = scmp.eq.s32.totalorder %s18, 0
      %p169 = por %p167, %p168
      %s170 = ssub.s32 %s19, %s31
      %p171 = scmp.eq.s32.totalorder %s170, 0
      %s173 = sadd.s32 %s172, 1
      %s174 = scalar_select %p171, %s172, %s173
      %p177 = pneg %p171
      %p178 = scmp.eq.s32.totalorder %s12, 1
      %p179 = por %p177, %p178
      %p180 = scmp.ne.s32.totalorder %s172, %s175
      %p181 = scmp.eq.s32.totalorder %s12, 0
      %p182 = por %p180, %p181
      %p183 = scmp.ne.s32.totalorder %s172, %s175
      %p184 = scmp.eq.s32.totalorder %s17, 1
      %p185 = por %p183, %p184
      %p186 = scmp.ne.s32.totalorder %s175, %s176
      %p187 = scmp.eq.s32.totalorder %s17, 0
      %p188 = por %p186, %p187
      %p189 = scmp.ne.s32.totalorder %s175, %s176
      %p190 = scmp.eq.s32.totalorder %s18, 1
      %p191 = por %p189, %p190
      %p193 = scmp.ne.s32.totalorder %s176, %s192
      %p194 = scmp.eq.s32.totalorder %s18, 0
      %p195 = por %p193, %p194
      %p196 = scmp.le.s32.totalorder 1, %s12
      %p197 = scmp.lt.s32.totalorder %s12, 3
      %p198 = pnand %p196, %p197
      %p199 = pneg %p198
      // Predicated region
      $region9: #{spectral_conv3d.1} parent=5 // pred_check
        _
      $region10: #{spectral_conv3d.1} parent=5 // pred_check_branch
        %201 = sbr.rel (%p198) target = $region12
      $region11: #{spectral_conv3d.1} parent=5 // pred_region
        %s202 = ssub.s32 %s12, 1
      $region12: #{spectral_conv3d.1} parent=5 // pred_fallthru
        _
      %p203 = scmp.lt.s32.totalorder %s12, 2
      // Predicated region
      $region13: #{spectral_conv3d.1} parent=5 // pred_check
        %p204 = pneg %p203
      $region14: #{spectral_conv3d.1} parent=5 // pred_check_branch
        %206 = sbr.rel (%p204) target = $region16
      $region15: #{spectral_conv3d.1} parent=5 // pred_region
        // Predicated region
        $region17: #{spectral_conv3d.1} parent=15 // pred_check
          %p207 = pneg %p46
        $region18: #{spectral_conv3d.1} parent=15 // pred_check_branch
          %209 = sbr.rel (%p207) target = $region20
        $region19: #{spectral_conv3d.1} parent=15 // pred_region
          %s210 = sand.u32 %s36, 1
          %s211 = sand.u32 %s36, 1
          %s212 = smul.addr %s211, 8
          %s213 = scalar_lea.vmem [#allocation2], %s212
          %s214 = smul.u32 4, %s20
          %s215 = smul.addr %s214, 2
          %s216 = sadd.s32 %s19, %s215
          %s217 = smul.addr %s216, 2
          %s218 = scalar_lea.vmem %s0, %s217
          // Predicated region
          $region21: #{spectral_conv3d.1} parent=19 // pred_check
            _
          $region22: #{spectral_conv3d.1} parent=19 // pred_check_branch
            %220 = sbr.rel (0) target = $region24
          $region23: #{spectral_conv3d.1} parent=19 // pred_region
            // Predicated region
            $region25: #{spectral_conv3d.1} parent=23 // pred_check
              _
            $region26: #{spectral_conv3d.1} parent=23 // pred_check_branch
              %222 = sbr.rel target = $region28
            $region27: #{spectral_conv3d.1} parent=23 // pred_region
              // Predicated region
              $region40: #{spectral_conv3d.1} parent=27 // pred_check
                _
              $region41: #{spectral_conv3d.1} parent=27 // pred_check_branch
                %243 = sbr.rel (0) target = $region43
              $region42: #{spectral_conv3d.1} parent=27 // pred_region
                loop: start=0, step=1, limit=1
                $region44: #{spectral_conv3d.1} parent=42 // loop_pre_header
                  _
                $region45: #{spectral_conv3d.1} parent=42 // loop_header
                  %s245 = sphi 0, %s249
                  %p246 = scmp.ge.s32.totalorder %s245, 1
                  %s250 = sphi %s218, %s218
                  %s251 = sphi %s213, %s213
                $region46: #{spectral_conv3d.1} parent=42 // loop_header_branch
                  %248 = sbr.rel (%p246) target = $region50
                $region47: #{spectral_conv3d.1} parent=42 // loop_body
                  _
                $region48: #{spectral_conv3d.1} parent=42 // loop_footer
                  %s249 = sadd.s32 1, %s245
                $region49: #{spectral_conv3d.1} parent=42 // loop_footer_branch
                  %244 = sbr.rel target = $region45
                $region50: #{spectral_conv3d.1} parent=42 // loop_exit
                  _
                loop: start=0, step=1, limit=1
                $region51: #{spectral_conv3d.1} parent=42 // loop_pre_header
                  _
                $region52: #{spectral_conv3d.1} parent=42 // loop_header
                  %s254 = sphi 0, %s258
                  %p255 = scmp.ge.s32.totalorder %s254, 1
                  %s259 = sphi %s218, %s218
                  %s260 = sphi %s213, %s213
                $region53: #{spectral_conv3d.1} parent=42 // loop_header_branch
                  %257 = sbr.rel (%p255) target = $region57
                $region54: #{spectral_conv3d.1} parent=42 // loop_body
                  %v261 = vld [vmem:[%s259] sm:$0x3]
                  %262 = vst [vmem:[%s260] sm:$0x3] %v261
                  %v263 = vld [vmem:[%s259 + $0x4] sm:$0x3]
                  %264 = vst [vmem:[%s260 + $0x2] sm:$0x3] %v263
                  %v265 = vld [vmem:[%s259 + $0x8] sm:$0x3]
                  %266 = vst [vmem:[%s260 + $0x4] sm:$0x3] %v265
                  %v267 = vld [vmem:[%s259 + $0xc] sm:$0x3]
                  %268 = vst [vmem:[%s260 + $0x6] sm:$0x3] %v267
                $region55: #{spectral_conv3d.1} parent=42 // loop_footer
                  %s258 = sadd.s32 1, %s254
                $region56: #{spectral_conv3d.1} parent=42 // loop_footer_branch
                  %253 = sbr.rel target = $region52
                $region57: #{spectral_conv3d.1} parent=42 // loop_exit
                  _
              $region43: #{spectral_conv3d.1} parent=27 // pred_fallthru
                _
            $region28: #{spectral_conv3d.1} parent=23 // pred_fallthru
              _
            // Predicated region
            $region29: #{spectral_conv3d.1} parent=23 // pred_check
              _
            $region30: #{spectral_conv3d.1} parent=23 // pred_check_branch
              %224 = sbr.rel (0) target = $region32
            $region31: #{spectral_conv3d.1} parent=23 // pred_region
              loop: start=0, step=1, limit=1
              $region33: #{spectral_conv3d.1} parent=31 // loop_pre_header
                _
              $region34: #{spectral_conv3d.1} parent=31 // loop_header
                %s227 = sphi 0, %s231
                %p228 = scmp.ge.s32.totalorder %s227, 1
                %s232 = sphi %s218, %s218
                %s233 = sphi %s213, %s213
              $region35: #{spectral_conv3d.1} parent=31 // loop_header_branch
                %230 = sbr.rel (%p228) target = $region39
              $region36: #{spectral_conv3d.1} parent=31 // loop_body
                %v234 = vld [vmem:[%s232] sm:$0x3]
                %235 = vst [vmem:[%s233] sm:$0x3] %v234
                %v236 = vld [vmem:[%s232 + $0x4] sm:$0x3]
                %237 = vst [vmem:[%s233 + $0x2] sm:$0x3] %v236
                %v238 = vld [vmem:[%s232 + $0x8] sm:$0x3]
                %239 = vst [vmem:[%s233 + $0x4] sm:$0x3] %v238
                %v240 = vld [vmem:[%s232 + $0xc] sm:$0x3]
                %241 = vst [vmem:[%s233 + $0x6] sm:$0x3] %v240
              $region37: #{spectral_conv3d.1} parent=31 // loop_footer
                %s231 = sadd.s32 1, %s227
              $region38: #{spectral_conv3d.1} parent=31 // loop_footer_branch
                %226 = sbr.rel target = $region34
              $region39: #{spectral_conv3d.1} parent=31 // loop_exit
                _
            $region32: #{spectral_conv3d.1} parent=23 // pred_fallthru
              _
          $region24: #{spectral_conv3d.1} parent=19 // pred_fallthru
            _
          %269 = vnop
        $region20: #{spectral_conv3d.1} parent=15 // pred_fallthru
          _
        // Predicated region
        $region58: #{spectral_conv3d.1} parent=15 // pred_check
          %p270 = pneg %p74
        $region59: #{spectral_conv3d.1} parent=15 // pred_check_branch
          %272 = sbr.rel (%p270) target = $region61
        $region60: #{spectral_conv3d.1} parent=15 // pred_region
          %s273 = sand.u32 %s64, 1
          %s274 = sand.u32 %s64, 1
          %s275 = smul.addr %s274, 8
          %s276 = scalar_lea.vmem [#allocation3], %s275
          %s277 = smul.u32 4, %s20
          %s278 = smul.addr %s277, 2
          %s279 = sadd.s32 %s19, %s278
          %s280 = smul.addr %s279, 2
          %s281 = scalar_lea.vmem %s1, %s280
          // Predicated region
          $region62: #{spectral_conv3d.1} parent=60 // pred_check
            _
          $region63: #{spectral_conv3d.1} parent=60 // pred_check_branch
            %283 = sbr.rel (0) target = $region65
          $region64: #{spectral_conv3d.1} parent=60 // pred_region
            // Predicated region
            $region66: #{spectral_conv3d.1} parent=64 // pred_check
              _
            $region67: #{spectral_conv3d.1} parent=64 // pred_check_branch
              %285 = sbr.rel target = $region69
            $region68: #{spectral_conv3d.1} parent=64 // pred_region
              // Predicated region
              $region81: #{spectral_conv3d.1} parent=68 // pred_check
                _
              $region82: #{spectral_conv3d.1} parent=68 // pred_check_branch
                %306 = sbr.rel (0) target = $region84
              $region83: #{spectral_conv3d.1} parent=68 // pred_region
                loop: start=0, step=1, limit=1
                $region85: #{spectral_conv3d.1} parent=83 // loop_pre_header
                  _
                $region86: #{spectral_conv3d.1} parent=83 // loop_header
                  %s308 = sphi 0, %s312
                  %p309 = scmp.ge.s32.totalorder %s308, 1
                  %s313 = sphi %s281, %s281
                  %s314 = sphi %s276, %s276
                $region87: #{spectral_conv3d.1} parent=83 // loop_header_branch
                  %311 = sbr.rel (%p309) target = $region91
                $region88: #{spectral_conv3d.1} parent=83 // loop_body
                  _
                $region89: #{spectral_conv3d.1} parent=83 // loop_footer
                  %s312 = sadd.s32 1, %s308
                $region90: #{spectral_conv3d.1} parent=83 // loop_footer_branch
                  %307 = sbr.rel target = $region86
                $region91: #{spectral_conv3d.1} parent=83 // loop_exit
                  _
                loop: start=0, step=1, limit=1
                $region92: #{spectral_conv3d.1} parent=83 // loop_pre_header
                  _
                $region93: #{spectral_conv3d.1} parent=83 // loop_header
                  %s317 = sphi 0, %s321
                  %p318 = scmp.ge.s32.totalorder %s317, 1
                  %s322 = sphi %s281, %s281
                  %s323 = sphi %s276, %s276
                $region94: #{spectral_conv3d.1} parent=83 // loop_header_branch
                  %320 = sbr.rel (%p318) target = $region98
                $region95: #{spectral_conv3d.1} parent=83 // loop_body
                  %v324 = vld [vmem:[%s322] sm:$0x3]
                  %325 = vst [vmem:[%s323] sm:$0x3] %v324
                  %v326 = vld [vmem:[%s322 + $0x4] sm:$0x3]
                  %327 = vst [vmem:[%s323 + $0x2] sm:$0x3] %v326
                  %v328 = vld [vmem:[%s322 + $0x8] sm:$0x3]
                  %329 = vst [vmem:[%s323 + $0x4] sm:$0x3] %v328
                  %v330 = vld [vmem:[%s322 + $0xc] sm:$0x3]
                  %331 = vst [vmem:[%s323 + $0x6] sm:$0x3] %v330
                $region96: #{spectral_conv3d.1} parent=83 // loop_footer
                  %s321 = sadd.s32 1, %s317
                $region97: #{spectral_conv3d.1} parent=83 // loop_footer_branch
                  %316 = sbr.rel target = $region93
                $region98: #{spectral_conv3d.1} parent=83 // loop_exit
                  _
              $region84: #{spectral_conv3d.1} parent=68 // pred_fallthru
                _
            $region69: #{spectral_conv3d.1} parent=64 // pred_fallthru
              _
            // Predicated region
            $region70: #{spectral_conv3d.1} parent=64 // pred_check
              _
            $region71: #{spectral_conv3d.1} parent=64 // pred_check_branch
              %287 = sbr.rel (0) target = $region73
            $region72: #{spectral_conv3d.1} parent=64 // pred_region
              loop: start=0, step=1, limit=1
              $region74: #{spectral_conv3d.1} parent=72 // loop_pre_header
                _
              $region75: #{spectral_conv3d.1} parent=72 // loop_header
                %s290 = sphi 0, %s294
                %p291 = scmp.ge.s32.totalorder %s290, 1
                %s295 = sphi %s281, %s281
                %s296 = sphi %s276, %s276
              $region76: #{spectral_conv3d.1} parent=72 // loop_header_branch
                %293 = sbr.rel (%p291) target = $region80
              $region77: #{spectral_conv3d.1} parent=72 // loop_body
                %v297 = vld [vmem:[%s295] sm:$0x3]
                %298 = vst [vmem:[%s296] sm:$0x3] %v297
                %v299 = vld [vmem:[%s295 + $0x4] sm:$0x3]
                %300 = vst [vmem:[%s296 + $0x2] sm:$0x3] %v299
                %v301 = vld [vmem:[%s295 + $0x8] sm:$0x3]
                %302 = vst [vmem:[%s296 + $0x4] sm:$0x3] %v301
                %v303 = vld [vmem:[%s295 + $0xc] sm:$0x3]
                %304 = vst [vmem:[%s296 + $0x6] sm:$0x3] %v303
              $region78: #{spectral_conv3d.1} parent=72 // loop_footer
                %s294 = sadd.s32 1, %s290
              $region79: #{spectral_conv3d.1} parent=72 // loop_footer_branch
                %289 = sbr.rel target = $region75
              $region80: #{spectral_conv3d.1} parent=72 // loop_exit
                _
            $region73: #{spectral_conv3d.1} parent=64 // pred_fallthru
              _
          $region65: #{spectral_conv3d.1} parent=60 // pred_fallthru
            _
          %332 = vnop
        $region61: #{spectral_conv3d.1} parent=15 // pred_fallthru
          _
        // Predicated region
        $region99: #{spectral_conv3d.1} parent=15 // pred_check
          %p333 = pneg %p102
        $region100: #{spectral_conv3d.1} parent=15 // pred_check_branch
          %335 = sbr.rel (%p333) target = $region102
        $region101: #{spectral_conv3d.1} parent=15 // pred_region
          %s336 = sand.u32 %s92, 1
          %s337 = sand.u32 %s92, 1
          %s338 = smul.addr %s337, 32
          %s339 = scalar_lea.vmem [#allocation4], %s338
          %s340 = smul.u32 4, %s20
          %s341 = smul.addr %s340, 2
          %s342 = sadd.s32 %s19, %s341
          %s343 = smul.addr %s342, 8
          %s344 = scalar_lea.vmem %s2, %s343
          // Predicated region
          $region103: #{spectral_conv3d.1} parent=101 // pred_check
            _
          $region104: #{spectral_conv3d.1} parent=101 // pred_check_branch
            %346 = sbr.rel (0) target = $region106
          $region105: #{spectral_conv3d.1} parent=101 // pred_region
            // Predicated region
            $region107: #{spectral_conv3d.1} parent=105 // pred_check
              _
            $region108: #{spectral_conv3d.1} parent=105 // pred_check_branch
              %348 = sbr.rel (0) target = $region110
            $region109: #{spectral_conv3d.1} parent=105 // pred_region
              // Predicated region
              $region122: #{spectral_conv3d.1} parent=109 // pred_check
                _
              $region123: #{spectral_conv3d.1} parent=109 // pred_check_branch
                %369 = sbr.rel (0) target = $region125
              $region124: #{spectral_conv3d.1} parent=109 // pred_region
                loop: start=0, step=1, limit=1
                $region126: #{spectral_conv3d.1} parent=124 // loop_pre_header
                  _
                $region127: #{spectral_conv3d.1} parent=124 // loop_header
                  %s371 = sphi 0, %s375
                  %p372 = scmp.ge.s32.totalorder %s371, 1
                  %s376 = sphi %s344, %s344
                  %s377 = sphi %s339, %s339
                $region128: #{spectral_conv3d.1} parent=124 // loop_header_branch
                  %374 = sbr.rel (%p372) target = $region132
                $region129: #{spectral_conv3d.1} parent=124 // loop_body
                  %v378 = vld [vmem:[%s376] sm:$0xff]
                  %379 = vst [vmem:[%s377] sm:$0xff] %v378
                  %v380 = vld [vmem:[%s376 + $0x10] sm:$0xff]
                  %381 = vst [vmem:[%s377 + $0x8] sm:$0xff] %v380
                  %v382 = vld [vmem:[%s376 + $0x20] sm:$0xff]
                  %383 = vst [vmem:[%s377 + $0x10] sm:$0xff] %v382
                  %v384 = vld [vmem:[%s376 + $0x30] sm:$0xff]
                  %385 = vst [vmem:[%s377 + $0x18] sm:$0xff] %v384
                $region130: #{spectral_conv3d.1} parent=124 // loop_footer
                  %s375 = sadd.s32 1, %s371
                $region131: #{spectral_conv3d.1} parent=124 // loop_footer_branch
                  %370 = sbr.rel target = $region127
                $region132: #{spectral_conv3d.1} parent=124 // loop_exit
                  _
              $region125: #{spectral_conv3d.1} parent=109 // pred_fallthru
                _
              // Predicated region
              $region133: #{spectral_conv3d.1} parent=109 // pred_check
                _
              $region134: #{spectral_conv3d.1} parent=109 // pred_check_branch
                %387 = sbr.rel target = $region136
              $region135: #{spectral_conv3d.1} parent=109 // pred_region
                _
              $region136: #{spectral_conv3d.1} parent=109 // pred_fallthru
                _
            $region110: #{spectral_conv3d.1} parent=105 // pred_fallthru
              _
            // Predicated region
            $region111: #{spectral_conv3d.1} parent=105 // pred_check
              _
            $region112: #{spectral_conv3d.1} parent=105 // pred_check_branch
              %350 = sbr.rel target = $region114
            $region113: #{spectral_conv3d.1} parent=105 // pred_region
              loop: start=0, step=1, limit=1
              $region115: #{spectral_conv3d.1} parent=113 // loop_pre_header
                _
              $region116: #{spectral_conv3d.1} parent=113 // loop_header
                %s353 = sphi 0, %s357
                %p354 = scmp.ge.s32.totalorder %s353, 1
                %s358 = sphi %s344, %s344
                %s359 = sphi %s339, %s339
              $region117: #{spectral_conv3d.1} parent=113 // loop_header_branch
                %356 = sbr.rel (%p354) target = $region121
              $region118: #{spectral_conv3d.1} parent=113 // loop_body
                %v360 = vld [vmem:[%s358] sm:$0xff]
                %361 = vst [vmem:[%s359] sm:$0xff] %v360
                %v362 = vld [vmem:[%s358 + $0x10] sm:$0xff]
                %363 = vst [vmem:[%s359 + $0x8] sm:$0xff] %v362
                %v364 = vld [vmem:[%s358 + $0x20] sm:$0xff]
                %365 = vst [vmem:[%s359 + $0x10] sm:$0xff] %v364
                %v366 = vld [vmem:[%s358 + $0x30] sm:$0xff]
                %367 = vst [vmem:[%s359 + $0x18] sm:$0xff] %v366
              $region119: #{spectral_conv3d.1} parent=113 // loop_footer
                %s357 = sadd.s32 1, %s353
              $region120: #{spectral_conv3d.1} parent=113 // loop_footer_branch
                %352 = sbr.rel target = $region116
              $region121: #{spectral_conv3d.1} parent=113 // loop_exit
                _
            $region114: #{spectral_conv3d.1} parent=105 // pred_fallthru
              _
          $region106: #{spectral_conv3d.1} parent=101 // pred_fallthru
            _
          %388 = vnop
        $region102: #{spectral_conv3d.1} parent=15 // pred_fallthru
          _
        // Predicated region
        $region137: #{spectral_conv3d.1} parent=15 // pred_check
          %p389 = pneg %p130
        $region138: #{spectral_conv3d.1} parent=15 // pred_check_branch
          %391 = sbr.rel (%p389) target = $region140
        $region139: #{spectral_conv3d.1} parent=15 // pred_region
          %s392 = sand.u32 %s120, 1
          %s393 = sand.u32 %s120, 1
          %s394 = smul.addr %s393, 32
          %s395 = scalar_lea.vmem [#allocation5], %s394
          %s396 = smul.u32 4, %s20
          %s397 = smul.addr %s396, 2
          %s398 = sadd.s32 %s19, %s397
          %s399 = smul.addr %s398, 8
          %s400 = scalar_lea.vmem %s3, %s399
          // Predicated region
          $region141: #{spectral_conv3d.1} parent=139 // pred_check
            _
          $region142: #{spectral_conv3d.1} parent=139 // pred_check_branch
            %402 = sbr.rel (0) target = $region144
          $region143: #{spectral_conv3d.1} parent=139 // pred_region
            // Predicated region
            $region145: #{spectral_conv3d.1} parent=143 // pred_check
              _
            $region146: #{spectral_conv3d.1} parent=143 // pred_check_branch
              %404 = sbr.rel (0) target = $region148
            $region147: #{spectral_conv3d.1} parent=143 // pred_region
              // Predicated region
              $region160: #{spectral_conv3d.1} parent=147 // pred_check
                _
              $region161: #{spectral_conv3d.1} parent=147 // pred_check_branch
                %425 = sbr.rel (0) target = $region163
              $region162: #{spectral_conv3d.1} parent=147 // pred_region
                loop: start=0, step=1, limit=1
                $region164: #{spectral_conv3d.1} parent=162 // loop_pre_header
                  _
                $region165: #{spectral_conv3d.1} parent=162 // loop_header
                  %s427 = sphi 0, %s431
                  %p428 = scmp.ge.s32.totalorder %s427, 1
                  %s432 = sphi %s400, %s400
                  %s433 = sphi %s395, %s395
                $region166: #{spectral_conv3d.1} parent=162 // loop_header_branch
                  %430 = sbr.rel (%p428) target = $region170
                $region167: #{spectral_conv3d.1} parent=162 // loop_body
                  %v434 = vld [vmem:[%s432] sm:$0xff]
                  %435 = vst [vmem:[%s433] sm:$0xff] %v434
                  %v436 = vld [vmem:[%s432 + $0x10] sm:$0xff]
                  %437 = vst [vmem:[%s433 + $0x8] sm:$0xff] %v436
                  %v438 = vld [vmem:[%s432 + $0x20] sm:$0xff]
                  %439 = vst [vmem:[%s433 + $0x10] sm:$0xff] %v438
                  %v440 = vld [vmem:[%s432 + $0x30] sm:$0xff]
                  %441 = vst [vmem:[%s433 + $0x18] sm:$0xff] %v440
                $region168: #{spectral_conv3d.1} parent=162 // loop_footer
                  %s431 = sadd.s32 1, %s427
                $region169: #{spectral_conv3d.1} parent=162 // loop_footer_branch
                  %426 = sbr.rel target = $region165
                $region170: #{spectral_conv3d.1} parent=162 // loop_exit
                  _
              $region163: #{spectral_conv3d.1} parent=147 // pred_fallthru
                _
              // Predicated region
              $region171: #{spectral_conv3d.1} parent=147 // pred_check
                _
              $region172: #{spectral_conv3d.1} parent=147 // pred_check_branch
                %443 = sbr.rel target = $region174
              $region173: #{spectral_conv3d.1} parent=147 // pred_region
                _
              $region174: #{spectral_conv3d.1} parent=147 // pred_fallthru
                _
            $region148: #{spectral_conv3d.1} parent=143 // pred_fallthru
              _
            // Predicated region
            $region149: #{spectral_conv3d.1} parent=143 // pred_check
              _
            $region150: #{spectral_conv3d.1} parent=143 // pred_check_branch
              %406 = sbr.rel target = $region152
            $region151: #{spectral_conv3d.1} parent=143 // pred_region
              loop: start=0, step=1, limit=1
              $region153: #{spectral_conv3d.1} parent=151 // loop_pre_header
                _
              $region154: #{spectral_conv3d.1} parent=151 // loop_header
                %s409 = sphi 0, %s413
                %p410 = scmp.ge.s32.totalorder %s409, 1
                %s414 = sphi %s400, %s400
                %s415 = sphi %s395, %s395
              $region155: #{spectral_conv3d.1} parent=151 // loop_header_branch
                %412 = sbr.rel (%p410) target = $region159
              $region156: #{spectral_conv3d.1} parent=151 // loop_body
                %v416 = vld [vmem:[%s414] sm:$0xff]
                %417 = vst [vmem:[%s415] sm:$0xff] %v416
                %v418 = vld [vmem:[%s414 + $0x10] sm:$0xff]
                %419 = vst [vmem:[%s415 + $0x8] sm:$0xff] %v418
                %v420 = vld [vmem:[%s414 + $0x20] sm:$0xff]
                %421 = vst [vmem:[%s415 + $0x10] sm:$0xff] %v420
                %v422 = vld [vmem:[%s414 + $0x30] sm:$0xff]
                %423 = vst [vmem:[%s415 + $0x18] sm:$0xff] %v422
              $region157: #{spectral_conv3d.1} parent=151 // loop_footer
                %s413 = sadd.s32 1, %s409
              $region158: #{spectral_conv3d.1} parent=151 // loop_footer_branch
                %408 = sbr.rel target = $region154
              $region159: #{spectral_conv3d.1} parent=151 // loop_exit
                _
            $region152: #{spectral_conv3d.1} parent=143 // pred_fallthru
              _
          $region144: #{spectral_conv3d.1} parent=139 // pred_fallthru
            _
          %444 = vnop
        $region140: #{spectral_conv3d.1} parent=15 // pred_fallthru
          _
      $region16: #{spectral_conv3d.1} parent=5 // pred_fallthru
        _
      %p445 = scmp.le.s32.totalorder 1, %s12
      %p446 = scmp.lt.s32.totalorder %s12, 3
      %p447 = pnand %p445, %p446
      %p448 = pneg %p447
      // Predicated region
      $region175: #{spectral_conv3d.1} parent=5 // pred_check
        _
      $region176: #{spectral_conv3d.1} parent=5 // pred_check_branch
        %450 = sbr.rel (%p447) target = $region178
      $region177: #{spectral_conv3d.1} parent=5 // pred_region
        %s451 = ssub.s32 %s12, 1
        %s452 = sand.u32 %s39, 1
        %s453 = sand.u32 %s39, 1
        %s454 = smul.addr %s453, 8
        %s455 = scalar_lea.vmem [#allocation2], %s454
        // Predicated region
        $region179: #{spectral_conv3d.1} parent=177 // pred_check
          %p456 = pneg %p52
        $region180: #{spectral_conv3d.1} parent=177 // pred_check_branch
          %458 = sbr.rel (%p456) target = $region182
        $region181: #{spectral_conv3d.1} parent=177 // pred_region
          _
        $region182: #{spectral_conv3d.1} parent=177 // pred_fallthru
          _
        %s459 = sand.u32 %s67, 1
        %s460 = sand.u32 %s67, 1
        %s461 = smul.addr %s460, 8
        %s462 = scalar_lea.vmem [#allocation3], %s461
        // Predicated region
        $region183: #{spectral_conv3d.1} parent=177 // pred_check
          %p463 = pneg %p80
        $region184: #{spectral_conv3d.1} parent=177 // pred_check_branch
          %465 = sbr.rel (%p463) target = $region186
        $region185: #{spectral_conv3d.1} parent=177 // pred_region
          _
        $region186: #{spectral_conv3d.1} parent=177 // pred_fallthru
          _
        %s466 = sand.u32 %s95, 1
        %s467 = sand.u32 %s95, 1
        %s468 = smul.addr %s467, 32
        %s469 = scalar_lea.vmem [#allocation4], %s468
        // Predicated region
        $region187: #{spectral_conv3d.1} parent=177 // pred_check
          %p470 = pneg %p108
        $region188: #{spectral_conv3d.1} parent=177 // pred_check_branch
          %472 = sbr.rel (%p470) target = $region190
        $region189: #{spectral_conv3d.1} parent=177 // pred_region
          _
        $region190: #{spectral_conv3d.1} parent=177 // pred_fallthru
          _
        %s473 = sand.u32 %s123, 1
        %s474 = sand.u32 %s123, 1
        %s475 = smul.addr %s474, 32
        %s476 = scalar_lea.vmem [#allocation5], %s475
        // Predicated region
        $region191: #{spectral_conv3d.1} parent=177 // pred_check
          %p477 = pneg %p136
        $region192: #{spectral_conv3d.1} parent=177 // pred_check_branch
          %479 = sbr.rel (%p477) target = $region194
        $region193: #{spectral_conv3d.1} parent=177 // pred_region
          _
        $region194: #{spectral_conv3d.1} parent=177 // pred_fallthru
          _
        %s480 = sand.u32 %s39, 1
        %s481 = sand.u32 %s39, 1
        %s482 = smul.addr %s481, 8
        %s483 = scalar_lea.vmem [#allocation2], %s482
        %p484 = pneg %p52
        %p485 = pneg %p49
        %s486 = sand.u32 %s67, 1
        %s487 = sand.u32 %s67, 1
        %s488 = smul.addr %s487, 8
        %s489 = scalar_lea.vmem [#allocation3], %s488
        %p490 = pneg %p80
        %p491 = pneg %p77
        %s492 = sand.u32 %s95, 1
        %s493 = sand.u32 %s95, 1
        %s494 = smul.addr %s493, 32
        %s495 = scalar_lea.vmem [#allocation4], %s494
        %p496 = pneg %p108
        %p497 = pneg %p105
        %s498 = sand.u32 %s123, 1
        %s499 = sand.u32 %s123, 1
        %s500 = smul.addr %s499, 32
        %s501 = scalar_lea.vmem [#allocation5], %s500
        %p502 = pneg %p136
        %p503 = pneg %p133
        %p504 = pneg %p162
        %p505 = pneg %p159
        %s506 = sand.u32 %s149, 1
        %s507 = sand.u32 %s149, 1
        %s508 = smul.addr %s507, 16
        %s509 = scalar_lea.vmem [#allocation6], %s508
        %p510 = pneg %p188
        %p511 = pneg %p185
        %s512 = sand.u32 %s175, 1
        %s513 = sand.u32 %s175, 1
        %s514 = smul.addr %s513, 16
        %s515 = scalar_lea.vmem [#allocation7], %s514
        %s516 = smul.u32 4, %s22
        %s517 = smul.u32 4, %s22
        %s518 = smul.u32 4, %s22
        %s519 = smul.u32 4, %s22
        %p520 = scmp.eq.s32.totalorder %s22, 0
        // Predicated region
        $region195: #{spectral_conv3d.1} parent=177 // pred_check
          %p521 = pneg %p520
        $region196: #{spectral_conv3d.1} parent=177 // pred_check_branch
          %523 = sbr.rel (%p521) target = $region198
        $region197: #{spectral_conv3d.1} parent=177 // pred_region
          %524 = vst [vmem:[%s509] sm:$0xff] 0.0
          %525 = vst [vmem:[%s509 + $0x8] sm:$0xff] 0.0
          %526 = vst [vmem:[%s515] sm:$0xff] 0.0
          %527 = vst [vmem:[%s515 + $0x8] sm:$0xff] 0.0
        $region198: #{spectral_conv3d.1} parent=177 // pred_fallthru
          _
        %v528 = vld [vmem:[%s509] sm:$0xff]
        %v529 = vld [vmem:[%s515] sm:$0xff]
        %v530 = vld [vmem:[%s455] sm:$0x1]
        %v531 = vld [vmem:[%s462] sm:$0x1]
        %v532 = vld [vmem:[%s469] sm:$0xff]
        %v533 = vld [vmem:[%s476] sm:$0xff]
        %v534 = vlaneseq
        %v535 = vshrl.u32 %v534, 7
        %v536 = vsub.s32 0, %v535
        %v537 = vrot.slane %v530, %v536
        %v538 = vmul.f32 %v537, %v532
        %v539 = vlaneseq
        %v540 = vshrl.u32 %v539, 7
        %v541 = vsub.s32 0, %v540
        %v542 = vrot.slane %v531, %v541
        %v543 = vmul.f32 %v542, %v533
        %v544 = vsub.f32 %v538, %v543
        %v545 = vadd.f32 %v528, %v544
        %v546 = vmul.f32 %v537, %v533
        %v547 = vmul.f32 %v542, %v532
        %v548 = vadd.f32 %v546, %v547
        %v549 = vadd.f32 %v529, %v548
        %s550 = sadd.s32 0, 2
        %s551 = scalar_lea.vmem %s455, %s550 [#allocation2]
        %v552 = vld [vmem:[%s551] sm:$0x1]
        %s553 = scalar_lea.vmem %s462, %s550 [#allocation3]
        %v554 = vld [vmem:[%s553] sm:$0x1]
        %s555 = sadd.s32 0, 8
        %s556 = scalar_lea.vmem %s469, %s555 [#allocation4]
        %v557 = vld [vmem:[%s556] sm:$0xff]
        %s558 = scalar_lea.vmem %s476, %s555 [#allocation5]
        %v559 = vld [vmem:[%s558] sm:$0xff]
        %v560 = vlaneseq
        %v561 = vshrl.u32 %v560, 7
        %v562 = vsub.s32 0, %v561
        %v563 = vrot.slane %v552, %v562
        %v564 = vmul.f32 %v563, %v557
        %v565 = vlaneseq
        %v566 = vshrl.u32 %v565, 7
        %v567 = vsub.s32 0, %v566
        %v568 = vrot.slane %v554, %v567
        %v569 = vmul.f32 %v568, %v559
        %v570 = vsub.f32 %v564, %v569
        %v571 = vadd.f32 %v545, %v570
        %v572 = vmul.f32 %v563, %v559
        %v573 = vmul.f32 %v568, %v557
        %v574 = vadd.f32 %v572, %v573
        %v575 = vadd.f32 %v549, %v574
        %s576 = sadd.s32 0, 4
        %s577 = scalar_lea.vmem %s455, %s576 [#allocation2]
        %v578 = vld [vmem:[%s577] sm:$0x1]
        %s579 = scalar_lea.vmem %s462, %s576 [#allocation3]
        %v580 = vld [vmem:[%s579] sm:$0x1]
        %s581 = sadd.s32 0, 16
        %s582 = scalar_lea.vmem %s469, %s581 [#allocation4]
        %v583 = vld [vmem:[%s582] sm:$0xff]
        %s584 = scalar_lea.vmem %s476, %s581 [#allocation5]
        %v585 = vld [vmem:[%s584] sm:$0xff]
        %v586 = vlaneseq
        %v587 = vshrl.u32 %v586, 7
        %v588 = vsub.s32 0, %v587
        %v589 = vrot.slane %v578, %v588
        %v590 = vmul.f32 %v589, %v583
        %v591 = vlaneseq
        %v592 = vshrl.u32 %v591, 7
        %v593 = vsub.s32 0, %v592
        %v594 = vrot.slane %v580, %v593
        %v595 = vmul.f32 %v594, %v585
        %v596 = vsub.f32 %v590, %v595
        %v597 = vadd.f32 %v571, %v596
        %v598 = vmul.f32 %v589, %v585
        %v599 = vmul.f32 %v594, %v583
        %v600 = vadd.f32 %v598, %v599
        %v601 = vadd.f32 %v575, %v600
        %s602 = sadd.s32 0, 6
        %s603 = scalar_lea.vmem %s455, %s602 [#allocation2]
        %v604 = vld [vmem:[%s603] sm:$0x1]
        %s605 = scalar_lea.vmem %s462, %s602 [#allocation3]
        %v606 = vld [vmem:[%s605] sm:$0x1]
        %s607 = sadd.s32 0, 24
        %s608 = scalar_lea.vmem %s469, %s607 [#allocation4]
        %v609 = vld [vmem:[%s608] sm:$0xff]
        %s610 = scalar_lea.vmem %s476, %s607 [#allocation5]
        %v611 = vld [vmem:[%s610] sm:$0xff]
        %v612 = vlaneseq
        %v613 = vshrl.u32 %v612, 7
        %v614 = vsub.s32 0, %v613
        %v615 = vrot.slane %v604, %v614
        %v616 = vmul.f32 %v615, %v609
        %v617 = vlaneseq
        %v618 = vshrl.u32 %v617, 7
        %v619 = vsub.s32 0, %v618
        %v620 = vrot.slane %v606, %v619
        %v621 = vmul.f32 %v620, %v611
        %v622 = vsub.f32 %v616, %v621
        %v623 = vadd.f32 %v597, %v622
        %v624 = vmul.f32 %v615, %v611
        %v625 = vmul.f32 %v620, %v609
        %v626 = vadd.f32 %v624, %v625
        %v627 = vadd.f32 %v601, %v626
        %628 = vst [vmem:[%s509] sm:$0xff] %v623
        %629 = vst [vmem:[%s515] sm:$0xff] %v627
        %s630 = scalar_lea.vmem %s509, %s555 [#allocation6]
        %v631 = vld [vmem:[%s630] sm:$0xff]
        %s632 = scalar_lea.vmem %s515, %s555 [#allocation7]
        %v633 = vld [vmem:[%s632] sm:$0xff]
        %v634 = vld [vmem:[%s455 + $0x1] sm:$0x1]
        %v635 = vld [vmem:[%s462 + $0x1] sm:$0x1]
        %v636 = vld [vmem:[%s469] sm:$0xff]
        %v637 = vld [vmem:[%s476] sm:$0xff]
        %v638 = vlaneseq
        %v639 = vshrl.u32 %v638, 7
        %v640 = vsub.s32 0, %v639
        %v641 = vrot.slane %v634, %v640
        %v642 = vmul.f32 %v641, %v636
        %v643 = vlaneseq
        %v644 = vshrl.u32 %v643, 7
        %v645 = vsub.s32 0, %v644
        %v646 = vrot.slane %v635, %v645
        %v647 = vmul.f32 %v646, %v637
        %v648 = vsub.f32 %v642, %v647
        %v649 = vadd.f32 %v631, %v648
        %v650 = vmul.f32 %v641, %v637
        %v651 = vmul.f32 %v646, %v636
        %v652 = vadd.f32 %v650, %v651
        %v653 = vadd.f32 %v633, %v652
        %v654 = vld [vmem:[%s551 + $0x1] sm:$0x1]
        %v655 = vld [vmem:[%s553 + $0x1] sm:$0x1]
        %v656 = vld [vmem:[%s556] sm:$0xff]
        %v657 = vld [vmem:[%s558] sm:$0xff]
        %v658 = vlaneseq
        %v659 = vshrl.u32 %v658, 7
        %v660 = vsub.s32 0, %v659
        %v661 = vrot.slane %v654, %v660
        %v662 = vmul.f32 %v661, %v656
        %v663 = vlaneseq
        %v664 = vshrl.u32 %v663, 7
        %v665 = vsub.s32 0, %v664
        %v666 = vrot.slane %v655, %v665
        %v667 = vmul.f32 %v666, %v657
        %v668 = vsub.f32 %v662, %v667
        %v669 = vadd.f32 %v649, %v668
        %v670 = vmul.f32 %v661, %v657
        %v671 = vmul.f32 %v666, %v656
        %v672 = vadd.f32 %v670, %v671
        %v673 = vadd.f32 %v653, %v672
        %v674 = vld [vmem:[%s577 + $0x1] sm:$0x1]
        %v675 = vld [vmem:[%s579 + $0x1] sm:$0x1]
        %v676 = vld [vmem:[%s582] sm:$0xff]
        %v677 = vld [vmem:[%s584] sm:$0xff]
        %v678 = vlaneseq
        %v679 = vshrl.u32 %v678, 7
        %v680 = vsub.s32 0, %v679
        %v681 = vrot.slane %v674, %v680
        %v682 = vmul.f32 %v681, %v676
        %v683 = vlaneseq
        %v684 = vshrl.u32 %v683, 7
        %v685 = vsub.s32 0, %v684
        %v686 = vrot.slane %v675, %v685
        %v687 = vmul.f32 %v686, %v677
        %v688 = vsub.f32 %v682, %v687
        %v689 = vadd.f32 %v669, %v688
        %v690 = vmul.f32 %v681, %v677
        %v691 = vmul.f32 %v686, %v676
        %v692 = vadd.f32 %v690, %v691
        %v693 = vadd.f32 %v673, %v692
        %v694 = vld [vmem:[%s603 + $0x1] sm:$0x1]
        %v695 = vld [vmem:[%s605 + $0x1] sm:$0x1]
        %v696 = vld [vmem:[%s608] sm:$0xff]
        %v697 = vld [vmem:[%s610] sm:$0xff]
        %v698 = vlaneseq
        %v699 = vshrl.u32 %v698, 7
        %v700 = vsub.s32 0, %v699
        %v701 = vrot.slane %v694, %v700
        %v702 = vmul.f32 %v701, %v696
        %v703 = vlaneseq
        %v704 = vshrl.u32 %v703, 7
        %v705 = vsub.s32 0, %v704
        %v706 = vrot.slane %v695, %v705
        %v707 = vmul.f32 %v706, %v697
        %v708 = vsub.f32 %v702, %v707
        %v709 = vadd.f32 %v689, %v708
        %v710 = vmul.f32 %v701, %v697
        %v711 = vmul.f32 %v706, %v696
        %v712 = vadd.f32 %v710, %v711
        %v713 = vadd.f32 %v693, %v712
        %714 = vst [vmem:[%s630] sm:$0xff] %v709
        %715 = vst [vmem:[%s632] sm:$0xff] %v713
        %s716 = sand.u32 %s149, 1
        %s717 = sand.u32 %s149, 1
        %s718 = smul.addr %s717, 16
        %s719 = scalar_lea.vmem [#allocation6], %s718
        %s720 = sand.u32 %s175, 1
        %s721 = sand.u32 %s175, 1
        %s722 = smul.addr %s721, 16
        %s723 = scalar_lea.vmem [#allocation7], %s722
        // Predicated region
        $region199: #{spectral_conv3d.1} parent=177 // pred_check
          %p724 = pneg %p159
        $region200: #{spectral_conv3d.1} parent=177 // pred_check_branch
          %726 = sbr.rel (%p724) target = $region202
        $region201: #{spectral_conv3d.1} parent=177 // pred_region
          %s727 = smul.addr %s21, 8
          %s728 = scalar_lea.vmem %s4, %s727
          // Predicated region
          $region203: #{spectral_conv3d.1} parent=201 // pred_check
            _
          $region204: #{spectral_conv3d.1} parent=201 // pred_check_branch
            %730 = sbr.rel (0) target = $region206
          $region205: #{spectral_conv3d.1} parent=201 // pred_region
            // Predicated region
            $region207: #{spectral_conv3d.1} parent=205 // pred_check
              _
            $region208: #{spectral_conv3d.1} parent=205 // pred_check_branch
              %732 = sbr.rel (0) target = $region210
            $region209: #{spectral_conv3d.1} parent=205 // pred_region
              // Predicated region
              $region222: #{spectral_conv3d.1} parent=209 // pred_check
                _
              $region223: #{spectral_conv3d.1} parent=209 // pred_check_branch
                %749 = sbr.rel (0) target = $region225
              $region224: #{spectral_conv3d.1} parent=209 // pred_region
                loop: start=0, step=1, limit=1
                $region226: #{spectral_conv3d.1} parent=224 // loop_pre_header
                  _
                $region227: #{spectral_conv3d.1} parent=224 // loop_header
                  %s751 = sphi 0, %s755
                  %p752 = scmp.ge.s32.totalorder %s751, 1
                  %s756 = sphi %s719, %s719
                  %s757 = sphi %s728, %s728
                $region228: #{spectral_conv3d.1} parent=224 // loop_header_branch
                  %754 = sbr.rel (%p752) target = $region232
                $region229: #{spectral_conv3d.1} parent=224 // loop_body
                  %v758 = vld [vmem:[%s756] sm:$0xff]
                  %759 = vst [vmem:[%s757] sm:$0xff] %v758
                  %v760 = vld [vmem:[%s756 + $0x8] sm:$0xff]
                  %761 = vst [vmem:[%s757 + $0x10] sm:$0xff] %v760
                $region230: #{spectral_conv3d.1} parent=224 // loop_footer
                  %s755 = sadd.s32 1, %s751
                $region231: #{spectral_conv3d.1} parent=224 // loop_footer_branch
                  %750 = sbr.rel target = $region227
                $region232: #{spectral_conv3d.1} parent=224 // loop_exit
                  _
              $region225: #{spectral_conv3d.1} parent=209 // pred_fallthru
                _
              // Predicated region
              $region233: #{spectral_conv3d.1} parent=209 // pred_check
                _
              $region234: #{spectral_conv3d.1} parent=209 // pred_check_branch
                %763 = sbr.rel target = $region236
              $region235: #{spectral_conv3d.1} parent=209 // pred_region
                _
              $region236: #{spectral_conv3d.1} parent=209 // pred_fallthru
                _
            $region210: #{spectral_conv3d.1} parent=205 // pred_fallthru
              _
            // Predicated region
            $region211: #{spectral_conv3d.1} parent=205 // pred_check
              _
            $region212: #{spectral_conv3d.1} parent=205 // pred_check_branch
              %734 = sbr.rel target = $region214
            $region213: #{spectral_conv3d.1} parent=205 // pred_region
              loop: start=0, step=1, limit=1
              $region215: #{spectral_conv3d.1} parent=213 // loop_pre_header
                _
              $region216: #{spectral_conv3d.1} parent=213 // loop_header
                %s737 = sphi 0, %s741
                %p738 = scmp.ge.s32.totalorder %s737, 1
                %s742 = sphi %s719, %s719
                %s743 = sphi %s728, %s728
              $region217: #{spectral_conv3d.1} parent=213 // loop_header_branch
                %740 = sbr.rel (%p738) target = $region221
              $region218: #{spectral_conv3d.1} parent=213 // loop_body
                %v744 = vld [vmem:[%s742] sm:$0xff]
                %745 = vst [vmem:[%s743] sm:$0xff] %v744
                %v746 = vld [vmem:[%s742 + $0x8] sm:$0xff]
                %747 = vst [vmem:[%s743 + $0x10] sm:$0xff] %v746
              $region219: #{spectral_conv3d.1} parent=213 // loop_footer
                %s741 = sadd.s32 1, %s737
              $region220: #{spectral_conv3d.1} parent=213 // loop_footer_branch
                %736 = sbr.rel target = $region216
              $region221: #{spectral_conv3d.1} parent=213 // loop_exit
                _
            $region214: #{spectral_conv3d.1} parent=205 // pred_fallthru
              _
          $region206: #{spectral_conv3d.1} parent=201 // pred_fallthru
            _
          %764 = vnop
        $region202: #{spectral_conv3d.1} parent=177 // pred_fallthru
          _
        // Predicated region
        $region237: #{spectral_conv3d.1} parent=177 // pred_check
          %p765 = pneg %p185
        $region238: #{spectral_conv3d.1} parent=177 // pred_check_branch
          %767 = sbr.rel (%p765) target = $region240
        $region239: #{spectral_conv3d.1} parent=177 // pred_region
          %s768 = smul.addr %s21, 8
          %s769 = scalar_lea.vmem %s5, %s768
          // Predicated region
          $region241: #{spectral_conv3d.1} parent=239 // pred_check
            _
          $region242: #{spectral_conv3d.1} parent=239 // pred_check_branch
            %771 = sbr.rel (0) target = $region244
          $region243: #{spectral_conv3d.1} parent=239 // pred_region
            // Predicated region
            $region245: #{spectral_conv3d.1} parent=243 // pred_check
              _
            $region246: #{spectral_conv3d.1} parent=243 // pred_check_branch
              %773 = sbr.rel (0) target = $region248
            $region247: #{spectral_conv3d.1} parent=243 // pred_region
              // Predicated region
              $region260: #{spectral_conv3d.1} parent=247 // pred_check
                _
              $region261: #{spectral_conv3d.1} parent=247 // pred_check_branch
                %790 = sbr.rel (0) target = $region263
              $region262: #{spectral_conv3d.1} parent=247 // pred_region
                loop: start=0, step=1, limit=1
                $region264: #{spectral_conv3d.1} parent=262 // loop_pre_header
                  _
                $region265: #{spectral_conv3d.1} parent=262 // loop_header
                  %s792 = sphi 0, %s796
                  %p793 = scmp.ge.s32.totalorder %s792, 1
                  %s797 = sphi %s723, %s723
                  %s798 = sphi %s769, %s769
                $region266: #{spectral_conv3d.1} parent=262 // loop_header_branch
                  %795 = sbr.rel (%p793) target = $region270
                $region267: #{spectral_conv3d.1} parent=262 // loop_body
                  %v799 = vld [vmem:[%s797] sm:$0xff]
                  %800 = vst [vmem:[%s798] sm:$0xff] %v799
                  %v801 = vld [vmem:[%s797 + $0x8] sm:$0xff]
                  %802 = vst [vmem:[%s798 + $0x10] sm:$0xff] %v801
                $region268: #{spectral_conv3d.1} parent=262 // loop_footer
                  %s796 = sadd.s32 1, %s792
                $region269: #{spectral_conv3d.1} parent=262 // loop_footer_branch
                  %791 = sbr.rel target = $region265
                $region270: #{spectral_conv3d.1} parent=262 // loop_exit
                  _
              $region263: #{spectral_conv3d.1} parent=247 // pred_fallthru
                _
              // Predicated region
              $region271: #{spectral_conv3d.1} parent=247 // pred_check
                _
              $region272: #{spectral_conv3d.1} parent=247 // pred_check_branch
                %804 = sbr.rel target = $region274
              $region273: #{spectral_conv3d.1} parent=247 // pred_region
                _
              $region274: #{spectral_conv3d.1} parent=247 // pred_fallthru
                _
            $region248: #{spectral_conv3d.1} parent=243 // pred_fallthru
              _
            // Predicated region
            $region249: #{spectral_conv3d.1} parent=243 // pred_check
              _
            $region250: #{spectral_conv3d.1} parent=243 // pred_check_branch
              %775 = sbr.rel target = $region252
            $region251: #{spectral_conv3d.1} parent=243 // pred_region
              loop: start=0, step=1, limit=1
              $region253: #{spectral_conv3d.1} parent=251 // loop_pre_header
                _
              $region254: #{spectral_conv3d.1} parent=251 // loop_header
                %s778 = sphi 0, %s782
                %p779 = scmp.ge.s32.totalorder %s778, 1
                %s783 = sphi %s723, %s723
                %s784 = sphi %s769, %s769
              $region255: #{spectral_conv3d.1} parent=251 // loop_header_branch
                %781 = sbr.rel (%p779) target = $region259
              $region256: #{spectral_conv3d.1} parent=251 // loop_body
                %v785 = vld [vmem:[%s783] sm:$0xff]
                %786 = vst [vmem:[%s784] sm:$0xff] %v785
                %v787 = vld [vmem:[%s783 + $0x8] sm:$0xff]
                %788 = vst [vmem:[%s784 + $0x10] sm:$0xff] %v787
              $region257: #{spectral_conv3d.1} parent=251 // loop_footer
                %s782 = sadd.s32 1, %s778
              $region258: #{spectral_conv3d.1} parent=251 // loop_footer_branch
                %777 = sbr.rel target = $region254
              $region259: #{spectral_conv3d.1} parent=251 // loop_exit
                _
            $region252: #{spectral_conv3d.1} parent=243 // pred_fallthru
              _
          $region244: #{spectral_conv3d.1} parent=239 // pred_fallthru
            _
          %805 = vnop
        $region240: #{spectral_conv3d.1} parent=177 // pred_fallthru
          _
      $region178: #{spectral_conv3d.1} parent=5 // pred_fallthru
        _
      %p806 = scmp.le.s32.totalorder 2, %s12
      // Predicated region
      $region275: #{spectral_conv3d.1} parent=5 // pred_check
        %p807 = pneg %p806
      $region276: #{spectral_conv3d.1} parent=5 // pred_check_branch
        %809 = sbr.rel (%p807) target = $region278
      $region277: #{spectral_conv3d.1} parent=5 // pred_region
        %s810 = ssub.s32 %s12, 2
        // Predicated region
        $region279: #{spectral_conv3d.1} parent=277 // pred_check
          %p811 = pneg %p165
        $region280: #{spectral_conv3d.1} parent=277 // pred_check_branch
          %813 = sbr.rel (%p811) target = $region282
        $region281: #{spectral_conv3d.1} parent=277 // pred_region
          %s814 = sand.u32 %s150, 1
          %s815 = sand.u32 %s150, 1
          %s816 = smul.addr %s815, 16
          %s817 = scalar_lea.vmem [#allocation6], %s816
        $region282: #{spectral_conv3d.1} parent=277 // pred_fallthru
          _
        // Predicated region
        $region283: #{spectral_conv3d.1} parent=277 // pred_check
          %p818 = pneg %p191
        $region284: #{spectral_conv3d.1} parent=277 // pred_check_branch
          %820 = sbr.rel (%p818) target = $region286
        $region285: #{spectral_conv3d.1} parent=277 // pred_region
          %s821 = sand.u32 %s176, 1
          %s822 = sand.u32 %s176, 1
          %s823 = smul.addr %s822, 16
          %s824 = scalar_lea.vmem [#allocation7], %s823
        $region286: #{spectral_conv3d.1} parent=277 // pred_fallthru
          _
      $region278: #{spectral_conv3d.1} parent=5 // pred_fallthru
        _
    $region6: #{spectral_conv3d.1} parent=1 // loop_footer
      %s16 = sadd.s32 1, %s12
    $region7: #{spectral_conv3d.1} parent=1 // loop_footer_branch
      %11 = sbr.rel target = $region3
    $region8: #{spectral_conv3d.1} parent=1 // loop_exit
      _

// kernel: reverse.1
$region0: #{reverse.1}
  #allocation0 [shape = 's32[1]{0}', space=sflag, size = 0x4, scoped, tag = 'scoped memory for reverse.1']
  %s0 = inlined_call_operand.vmem [shape: f32[2,4,16,16,7], index: 0, kind: input, shape index: {}]
  %s1 = inlined_call_operand.vmem [shape: f32[2,4,16,16,7], index: 1, kind: output, shape index: {}]
  %s2 = scalar_lea.vmem %s0, 96
  %v3 = vld [vmem:[%s2] sm:$0xff]
  %4 = vst [vmem:[%s1] sm:$0xff] %v3
  %s5 = scalar_lea.vmem %s0, 544
  %v6 = vld [vmem:[%s5] sm:$0xff]
  %s7 = scalar_lea.vmem %s1, 448
  %8 = vst [vmem:[%s7] sm:$0xff] %v6
  %s9 = scalar_lea.vmem %s0, 208
  %v10 = vld [vmem:[%s9] sm:$0xff]
  %s11 = scalar_lea.vmem %s1, 112
  %12 = vst [vmem:[%s11] sm:$0xff] %v10
  %s13 = scalar_lea.vmem %s0, 656
  %v14 = vld [vmem:[%s13] sm:$0xff]
  %s15 = scalar_lea.vmem %s1, 560
  %16 = vst [vmem:[%s15] sm:$0xff] %v14
  %s17 = scalar_lea.vmem %s0, 320
  %v18 = vld [vmem:[%s17] sm:$0xff]
  %s19 = scalar_lea.vmem %s1, 224
  %20 = vst [vmem:[%s19] sm:$0xff] %v18
  %s21 = scalar_lea.vmem %s0, 768
  %v22 = vld [vmem:[%s21] sm:$0xff]
  %s23 = scalar_lea.vmem %s1, 672
  %24 = vst [vmem:[%s23] sm:$0xff] %v22
  %s25 = scalar_lea.vmem %s0, 432
  %v26 = vld [vmem:[%s25] sm:$0xff]
  %s27 = scalar_lea.vmem %s1, 336
  %28 = vst [vmem:[%s27] sm:$0xff] %v26
  %s29 = scalar_lea.vmem %s0, 880
  %v30 = vld [vmem:[%s29] sm:$0xff]
  %s31 = scalar_lea.vmem %s1, 784
  %32 = vst [vmem:[%s31] sm:$0xff] %v30
  %s33 = scalar_lea.vmem %s0, 80
  %v34 = vld [vmem:[%s33] sm:$0xff]
  %s35 = scalar_lea.vmem %s1, 16
  %36 = vst [vmem:[%s35] sm:$0xff] %v34
  %s37 = scalar_lea.vmem %s0, 528
  %v38 = vld [vmem:[%s37] sm:$0xff]
  %s39 = scalar_lea.vmem %s1, 464
  %40 = vst [vmem:[%s39] sm:$0xff] %v38
  %s41 = scalar_lea.vmem %s0, 192
  %v42 = vld [vmem:[%s41] sm:$0xff]
  %s43 = scalar_lea.vmem %s1, 128
  %44 = vst [vmem:[%s43] sm:$0xff] %v42
  %s45 = scalar_lea.vmem %s0, 640
  %v46 = vld [vmem:[%s45] sm:$0xff]
  %s47 = scalar_lea.vmem %s1, 576
  %48 = vst [vmem:[%s47] sm:$0xff] %v46
  %s49 = scalar_lea.vmem %s0, 304
  %v50 = vld [vmem:[%s49] sm:$0xff]
  %s51 = scalar_lea.vmem %s1, 240
  %52 = vst [vmem:[%s51] sm:$0xff] %v50
  %s53 = scalar_lea.vmem %s0, 752
  %v54 = vld [vmem:[%s53] sm:$0xff]
  %s55 = scalar_lea.vmem %s1, 688
  %56 = vst [vmem:[%s55] sm:$0xff] %v54
  %s57 = scalar_lea.vmem %s0, 416
  %v58 = vld [vmem:[%s57] sm:$0xff]
  %s59 = scalar_lea.vmem %s1, 352
  %60 = vst [vmem:[%s59] sm:$0xff] %v58
  %s61 = scalar_lea.vmem %s0, 864
  %v62 = vld [vmem:[%s61] sm:$0xff]
  %s63 = scalar_lea.vmem %s1, 800
  %64 = vst [vmem:[%s63] sm:$0xff] %v62
  %s65 = scalar_lea.vmem %s0, 64
  %v66 = vld [vmem:[%s65] sm:$0xff]
  %s67 = scalar_lea.vmem %s1, 32
  %68 = vst [vmem:[%s67] sm:$0xff] %v66
  %s69 = scalar_lea.vmem %s0, 512
  %v70 = vld [vmem:[%s69] sm:$0xff]
  %s71 = scalar_lea.vmem %s1, 480
  %72 = vst [vmem:[%s71] sm:$0xff] %v70
  %s73 = scalar_lea.vmem %s0, 176
  %v74 = vld [vmem:[%s73] sm:$0xff]
  %s75 = scalar_lea.vmem %s1, 144
  %76 = vst [vmem:[%s75] sm:$0xff] %v74
  %s77 = scalar_lea.vmem %s0, 624
  %v78 = vld [vmem:[%s77] sm:$0xff]
  %s79 = scalar_lea.vmem %s1, 592
  %80 = vst [vmem:[%s79] sm:$0xff] %v78
  %s81 = scalar_lea.vmem %s0, 288
  %v82 = vld [vmem:[%s81] sm:$0xff]
  %s83 = scalar_lea.vmem %s1, 256
  %84 = vst [vmem:[%s83] sm:$0xff] %v82
  %s85 = scalar_lea.vmem %s0, 736
  %v86 = vld [vmem:[%s85] sm:$0xff]
  %s87 = scalar_lea.vmem %s1, 704
  %88 = vst [vmem:[%s87] sm:$0xff] %v86
  %s89 = scalar_lea.vmem %s0, 400
  %v90 = vld [vmem:[%s89] sm:$0xff]
  %s91 = scalar_lea.vmem %s1, 368
  %92 = vst [vmem:[%s91] sm:$0xff] %v90
  %s93 = scalar_lea.vmem %s0, 848
  %v94 = vld [vmem:[%s93] sm:$0xff]
  %s95 = scalar_lea.vmem %s1, 816
  %96 = vst [vmem:[%s95] sm:$0xff] %v94
  %s97 = scalar_lea.vmem %s0, 48
  %v98 = vld [vmem:[%s97] sm:$0xff]
  %s99 = scalar_lea.vmem %s1, 48
  %100 = vst [vmem:[%s99] sm:$0xff] %v98
  %s101 = scalar_lea.vmem %s0, 496
  %v102 = vld [vmem:[%s101] sm:$0xff]
  %s103 = scalar_lea.vmem %s1, 496
  %104 = vst [vmem:[%s103] sm:$0xff] %v102
  %s105 = scalar_lea.vmem %s0, 160
  %v106 = vld [vmem:[%s105] sm:$0xff]
  %s107 = scalar_lea.vmem %s1, 160
  %108 = vst [vmem:[%s107] sm:$0xff] %v106
  %s109 = scalar_lea.vmem %s0, 608
  %v110 = vld [vmem:[%s109] sm:$0xff]
  %s111 = scalar_lea.vmem %s1, 608
  %112 = vst [vmem:[%s111] sm:$0xff] %v110
  %s113 = scalar_lea.vmem %s0, 272
  %v114 = vld [vmem:[%s113] sm:$0xff]
  %s115 = scalar_lea.vmem %s1, 272
  %116 = vst [vmem:[%s115] sm:$0xff] %v114
  %s117 = scalar_lea.vmem %s0, 720
  %v118 = vld [vmem:[%s117] sm:$0xff]
  %s119 = scalar_lea.vmem %s1, 720
  %120 = vst [vmem:[%s119] sm:$0xff] %v118
  %s121 = scalar_lea.vmem %s0, 384
  %v122 = vld [vmem:[%s121] sm:$0xff]
  %s123 = scalar_lea.vmem %s1, 384
  %124 = vst [vmem:[%s123] sm:$0xff] %v122
  %s125 = scalar_lea.vmem %s0, 832
  %v126 = vld [vmem:[%s125] sm:$0xff]
  %s127 = scalar_lea.vmem %s1, 832
  %128 = vst [vmem:[%s127] sm:$0xff] %v126
  %s129 = scalar_lea.vmem %s0, 32
  %v130 = vld [vmem:[%s129] sm:$0xff]
  %s131 = scalar_lea.vmem %s1, 64
  %132 = vst [vmem:[%s131] sm:$0xff] %v130
  %s133 = scalar_lea.vmem %s0, 480
  %v134 = vld [vmem:[%s133] sm:$0xff]
  %s135 = scalar_lea.vmem %s1, 512
  %136 = vst [vmem:[%s135] sm:$0xff] %v134
  %s137 = scalar_lea.vmem %s0, 144
  %v138 = vld [vmem:[%s137] sm:$0xff]
  %s139 = scalar_lea.vmem %s1, 176
  %140 = vst [vmem:[%s139] sm:$0xff] %v138
  %s141 = scalar_lea.vmem %s0, 592
  %v142 = vld [vmem:[%s141] sm:$0xff]
  %s143 = scalar_lea.vmem %s1, 624
  %144 = vst [vmem:[%s143] sm:$0xff] %v142
  %s145 = scalar_lea.vmem %s0, 256
  %v146 = vld [vmem:[%s145] sm:$0xff]
  %s147 = scalar_lea.vmem %s1, 288
  %148 = vst [vmem:[%s147] sm:$0xff] %v146
  %s149 = scalar_lea.vmem %s0, 704
  %v150 = vld [vmem:[%s149] sm:$0xff]
  %s151 = scalar_lea.vmem %s1, 736
  %152 = vst [vmem:[%s151] sm:$0xff] %v150
  %s153 = scalar_lea.vmem %s0, 368
  %v154 = vld [vmem:[%s153] sm:$0xff]
  %s155 = scalar_lea.vmem %s1, 400
  %156 = vst [vmem:[%s155] sm:$0xff] %v154
  %s157 = scalar_lea.vmem %s0, 816
  %v158 = vld [vmem:[%s157] sm:$0xff]
  %s159 = scalar_lea.vmem %s1, 848
  %160 = vst [vmem:[%s159] sm:$0xff] %v158
  %s161 = scalar_lea.vmem %s0, 16
  %v162 = vld [vmem:[%s161] sm:$0xff]
  %s163 = scalar_lea.vmem %s1, 80
  %164 = vst [vmem:[%s163] sm:$0xff] %v162
  %s165 = scalar_lea.vmem %s0, 464
  %v166 = vld [vmem:[%s165] sm:$0xff]
  %s167 = scalar_lea.vmem %s1, 528
  %168 = vst [vmem:[%s167] sm:$0xff] %v166
  %s169 = scalar_lea.vmem %s0, 128
  %v170 = vld [vmem:[%s169] sm:$0xff]
  %s171 = scalar_lea.vmem %s1, 192
  %172 = vst [vmem:[%s171] sm:$0xff] %v170
  %s173 = scalar_lea.vmem %s0, 576
  %v174 = vld [vmem:[%s173] sm:$0xff]
  %s175 = scalar_lea.vmem %s1, 640
  %176 = vst [vmem:[%s175] sm:$0xff] %v174
  %s177 = scalar_lea.vmem %s0, 240
  %v178 = vld [vmem:[%s177] sm:$0xff]
  %s179 = scalar_lea.vmem %s1, 304
  %180 = vst [vmem:[%s179] sm:$0xff] %v178
  %s181 = scalar_lea.vmem %s0, 688
  %v182 = vld [vmem:[%s181] sm:$0xff]
  %s183 = scalar_lea.vmem %s1, 752
  %184 = vst [vmem:[%s183] sm:$0xff] %v182
  %s185 = scalar_lea.vmem %s0, 352
  %v186 = vld [vmem:[%s185] sm:$0xff]
  %s187 = scalar_lea.vmem %s1, 416
  %188 = vst [vmem:[%s187] sm:$0xff] %v186
  %s189 = scalar_lea.vmem %s0, 800
  %v190 = vld [vmem:[%s189] sm:$0xff]
  %s191 = scalar_lea.vmem %s1, 864
  %192 = vst [vmem:[%s191] sm:$0xff] %v190
  %v193 = vld [vmem:[%s0] sm:$0xff]
  %s194 = scalar_lea.vmem %s1, 96
  %195 = vst [vmem:[%s194] sm:$0xff] %v193
  %s196 = scalar_lea.vmem %s0, 448
  %v197 = vld [vmem:[%s196] sm:$0xff]
  %s198 = scalar_lea.vmem %s1, 544
  %199 = vst [vmem:[%s198] sm:$0xff] %v197
  %s200 = scalar_lea.vmem %s0, 112
  %v201 = vld [vmem:[%s200] sm:$0xff]
  %s202 = scalar_lea.vmem %s1, 208
  %203 = vst [vmem:[%s202] sm:$0xff] %v201
  %s204 = scalar_lea.vmem %s0, 560
  %v205 = vld [vmem:[%s204] sm:$0xff]
  %s206 = scalar_lea.vmem %s1, 656
  %207 = vst [vmem:[%s206] sm:$0xff] %v205
  %s208 = scalar_lea.vmem %s0, 224
  %v209 = vld [vmem:[%s208] sm:$0xff]
  %s210 = scalar_lea.vmem %s1, 320
  %211 = vst [vmem:[%s210] sm:$0xff] %v209
  %s212 = scalar_lea.vmem %s0, 672
  %v213 = vld [vmem:[%s212] sm:$0xff]
  %s214 = scalar_lea.vmem %s1, 768
  %215 = vst [vmem:[%s214] sm:$0xff] %v213
  %s216 = scalar_lea.vmem %s0, 336
  %v217 = vld [vmem:[%s216] sm:$0xff]
  %s218 = scalar_lea.vmem %s1, 432
  %219 = vst [vmem:[%s218] sm:$0xff] %v217
  %s220 = scalar_lea.vmem %s0, 784
  %v221 = vld [vmem:[%s220] sm:$0xff]
  %s222 = scalar_lea.vmem %s1, 880
  %223 = vst [vmem:[%s222] sm:$0xff] %v221
  %s224 = scalar_lea.vmem %s0, 104
  %v225 = vld [vmem:[%s224] sm:$0xff]
  %s226 = scalar_lea.vmem %s1, 8
  %227 = vst [vmem:[%s226] sm:$0xff] %v225
  %s228 = scalar_lea.vmem %s0, 552
  %v229 = vld [vmem:[%s228] sm:$0xff]
  %s230 = scalar_lea.vmem %s1, 456
  %231 = vst [vmem:[%s230] sm:$0xff] %v229
  %s232 = scalar_lea.vmem %s0, 216
  %v233 = vld [vmem:[%s232] sm:$0xff]
  %s234 = scalar_lea.vmem %s1, 120
  %235 = vst [vmem:[%s234] sm:$0xff] %v233
  %s236 = scalar_lea.vmem %s0, 664
  %v237 = vld [vmem:[%s236] sm:$0xff]
  %s238 = scalar_lea.vmem %s1, 568
  %239 = vst [vmem:[%s238] sm:$0xff] %v237
  %s240 = scalar_lea.vmem %s0, 328
  %v241 = vld [vmem:[%s240] sm:$0xff]
  %s242 = scalar_lea.vmem %s1, 232
  %243 = vst [vmem:[%s242] sm:$0xff] %v241
  %s244 = scalar_lea.vmem %s0, 776
  %v245 = vld [vmem:[%s244] sm:$0xff]
  %s246 = scalar_lea.vmem %s1, 680
  %247 = vst [vmem:[%s246] sm:$0xff] %v245
  %s248 = scalar_lea.vmem %s0, 440
  %v249 = vld [vmem:[%s248] sm:$0xff]
  %s250 = scalar_lea.vmem %s1, 344
  %251 = vst [vmem:[%s250] sm:$0xff] %v249
  %s252 = scalar_lea.vmem %s0, 888
  %v253 = vld [vmem:[%s252] sm:$0xff]
  %s254 = scalar_lea.vmem %s1, 792
  %255 = vst [vmem:[%s254] sm:$0xff] %v253
  %s256 = scalar_lea.vmem %s0, 88
  %v257 = vld [vmem:[%s256] sm:$0xff]
  %s258 = scalar_lea.vmem %s1, 24
  %259 = vst [vmem:[%s258] sm:$0xff] %v257
  %s260 = scalar_lea.vmem %s0, 536
  %v261 = vld [vmem:[%s260] sm:$0xff]
  %s262 = scalar_lea.vmem %s1, 472
  %263 = vst [vmem:[%s262] sm:$0xff] %v261
  %s264 = scalar_lea.vmem %s0, 200
  %v265 = vld [vmem:[%s264] sm:$0xff]
  %s266 = scalar_lea.vmem %s1, 136
  %267 = vst [vmem:[%s266] sm:$0xff] %v265
  %s268 = scalar_lea.vmem %s0, 648
  %v269 = vld [vmem:[%s268] sm:$0xff]
  %s270 = scalar_lea.vmem %s1, 584
  %271 = vst [vmem:[%s270] sm:$0xff] %v269
  %s272 = scalar_lea.vmem %s0, 312
  %v273 = vld [vmem:[%s272] sm:$0xff]
  %s274 = scalar_lea.vmem %s1, 248
  %275 = vst [vmem:[%s274] sm:$0xff] %v273
  %s276 = scalar_lea.vmem %s0, 760
  %v277 = vld [vmem:[%s276] sm:$0xff]
  %s278 = scalar_lea.vmem %s1, 696
  %279 = vst [vmem:[%s278] sm:$0xff] %v277
  %s280 = scalar_lea.vmem %s0, 424
  %v281 = vld [vmem:[%s280] sm:$0xff]
  %s282 = scalar_lea.vmem %s1, 360
  %283 = vst [vmem:[%s282] sm:$0xff] %v281
  %s284 = scalar_lea.vmem %s0, 872
  %v285 = vld [vmem:[%s284] sm:$0xff]
  %s286 = scalar_lea.vmem %s1, 808
  %287 = vst [vmem:[%s286] sm:$0xff] %v285
  %s288 = scalar_lea.vmem %s0, 72
  %v289 = vld [vmem:[%s288] sm:$0xff]
  %s290 = scalar_lea.vmem %s1, 40
  %291 = vst [vmem:[%s290] sm:$0xff] %v289
  %s292 = scalar_lea.vmem %s0, 520
  %v293 = vld [vmem:[%s292] sm:$0xff]
  %s294 = scalar_lea.vmem %s1, 488
  %295 = vst [vmem:[%s294] sm:$0xff] %v293
  %s296 = scalar_lea.vmem %s0, 184
  %v297 = vld [vmem:[%s296] sm:$0xff]
  %s298 = scalar_lea.vmem %s1, 152
  %299 = vst [vmem:[%s298] sm:$0xff] %v297
  %s300 = scalar_lea.vmem %s0, 632
  %v301 = vld [vmem:[%s300] sm:$0xff]
  %s302 = scalar_lea.vmem %s1, 600
  %303 = vst [vmem:[%s302] sm:$0xff] %v301
  %s304 = scalar_lea.vmem %s0, 296
  %v305 = vld [vmem:[%s304] sm:$0xff]
  %s306 = scalar_lea.vmem %s1, 264
  %307 = vst [vmem:[%s306] sm:$0xff] %v305
  %s308 = scalar_lea.vmem %s0, 744
  %v309 = vld [vmem:[%s308] sm:$0xff]
  %s310 = scalar_lea.vmem %s1, 712
  %311 = vst [vmem:[%s310] sm:$0xff] %v309
  %s312 = scalar_lea.vmem %s0, 408
  %v313 = vld [vmem:[%s312] sm:$0xff]
  %s314 = scalar_lea.vmem %s1, 376
  %315 = vst [vmem:[%s314] sm:$0xff] %v313
  %s316 = scalar_lea.vmem %s0, 856
  %v317 = vld [vmem:[%s316] sm:$0xff]
  %s318 = scalar_lea.vmem %s1, 824
  %319 = vst [vmem:[%s318] sm:$0xff] %v317
  %s320 = scalar_lea.vmem %s0, 56
  %v321 = vld [vmem:[%s320] sm:$0xff]
  %s322 = scalar_lea.vmem %s1, 56
  %323 = vst [vmem:[%s322] sm:$0xff] %v321
  %s324 = scalar_lea.vmem %s0, 504
  %v325 = vld [vmem:[%s324] sm:$0xff]
  %s326 = scalar_lea.vmem %s1, 504
  %327 = vst [vmem:[%s326] sm:$0xff] %v325
  %s328 = scalar_lea.vmem %s0, 168
  %v329 = vld [vmem:[%s328] sm:$0xff]
  %s330 = scalar_lea.vmem %s1, 168
  %331 = vst [vmem:[%s330] sm:$0xff] %v329
  %s332 = scalar_lea.vmem %s0, 616
  %v333 = vld [vmem:[%s332] sm:$0xff]
  %s334 = scalar_lea.vmem %s1, 616
  %335 = vst [vmem:[%s334] sm:$0xff] %v333
  %s336 = scalar_lea.vmem %s0, 280
  %v337 = vld [vmem:[%s336] sm:$0xff]
  %s338 = scalar_lea.vmem %s1, 280
  %339 = vst [vmem:[%s338] sm:$0xff] %v337
  %s340 = scalar_lea.vmem %s0, 728
  %v341 = vld [vmem:[%s340] sm:$0xff]
  %s342 = scalar_lea.vmem %s1, 728
  %343 = vst [vmem:[%s342] sm:$0xff] %v341
  %s344 = scalar_lea.vmem %s0, 392
  %v345 = vld [vmem:[%s344] sm:$0xff]
  %s346 = scalar_lea.vmem %s1, 392
  %347 = vst [vmem:[%s346] sm:$0xff] %v345
  %s348 = scalar_lea.vmem %s0, 840
  %v349 = vld [vmem:[%s348] sm:$0xff]
  %s350 = scalar_lea.vmem %s1, 840
  %351 = vst [vmem:[%s350] sm:$0xff] %v349
  %s352 = scalar_lea.vmem %s0, 40
  %v353 = vld [vmem:[%s352] sm:$0xff]
  %s354 = scalar_lea.vmem %s1, 72
  %355 = vst [vmem:[%s354] sm:$0xff] %v353
  %s356 = scalar_lea.vmem %s0, 488
  %v357 = vld [vmem:[%s356] sm:$0xff]
  %s358 = scalar_lea.vmem %s1, 520
  %359 = vst [vmem:[%s358] sm:$0xff] %v357
  %s360 = scalar_lea.vmem %s0, 152
  %v361 = vld [vmem:[%s360] sm:$0xff]
  %s362 = scalar_lea.vmem %s1, 184
  %363 = vst [vmem:[%s362] sm:$0xff] %v361
  %s364 = scalar_lea.vmem %s0, 600
  %v365 = vld [vmem:[%s364] sm:$0xff]
  %s366 = scalar_lea.vmem %s1, 632
  %367 = vst [vmem:[%s366] sm:$0xff] %v365
  %s368 = scalar_lea.vmem %s0, 264
  %v369 = vld [vmem:[%s368] sm:$0xff]
  %s370 = scalar_lea.vmem %s1, 296
  %371 = vst [vmem:[%s370] sm:$0xff] %v369
  %s372 = scalar_lea.vmem %s0, 712
  %v373 = vld [vmem:[%s372] sm:$0xff]
  %s374 = scalar_lea.vmem %s1, 744
  %375 = vst [vmem:[%s374] sm:$0xff] %v373
  %s376 = scalar_lea.vmem %s0, 376
  %v377 = vld [vmem:[%s376] sm:$0xff]
  %s378 = scalar_lea.vmem %s1, 408
  %379 = vst [vmem:[%s378] sm:$0xff] %v377
  %s380 = scalar_lea.vmem %s0, 824
  %v381 = vld [vmem:[%s380] sm:$0xff]
  %s382 = scalar_lea.vmem %s1, 856
  %383 = vst [vmem:[%s382] sm:$0xff] %v381
  %s384 = scalar_lea.vmem %s0, 24
  %v385 = vld [vmem:[%s384] sm:$0xff]
  %s386 = scalar_lea.vmem %s1, 88
  %387 = vst [vmem:[%s386] sm:$0xff] %v385
  %s388 = scalar_lea.vmem %s0, 472
  %v389 = vld [vmem:[%s388] sm:$0xff]
  %s390 = scalar_lea.vmem %s1, 536
  %391 = vst [vmem:[%s390] sm:$0xff] %v389
  %s392 = scalar_lea.vmem %s0, 136
  %v393 = vld [vmem:[%s392] sm:$0xff]
  %s394 = scalar_lea.vmem %s1, 200
  %395 = vst [vmem:[%s394] sm:$0xff] %v393
  %s396 = scalar_lea.vmem %s0, 584
  %v397 = vld [vmem:[%s396] sm:$0xff]
  %s398 = scalar_lea.vmem %s1, 648
  %399 = vst [vmem:[%s398] sm:$0xff] %v397
  %s400 = scalar_lea.vmem %s0, 248
  %v401 = vld [vmem:[%s400] sm:$0xff]
  %s402 = scalar_lea.vmem %s1, 312
  %403 = vst [vmem:[%s402] sm:$0xff] %v401
  %s404 = scalar_lea.vmem %s0, 696
  %v405 = vld [vmem:[%s404] sm:$0xff]
  %s406 = scalar_lea.vmem %s1, 760
  %407 = vst [vmem:[%s406] sm:$0xff] %v405
  %s408 = scalar_lea.vmem %s0, 360
  %v409 = vld [vmem:[%s408] sm:$0xff]
  %s410 = scalar_lea.vmem %s1, 424
  %411 = vst [vmem:[%s410] sm:$0xff] %v409
  %s412 = scalar_lea.vmem %s0, 808
  %v413 = vld [vmem:[%s412] sm:$0xff]
  %s414 = scalar_lea.vmem %s1, 872
  %415 = vst [vmem:[%s414] sm:$0xff] %v413
  %s416 = scalar_lea.vmem %s0, 8
  %v417 = vld [vmem:[%s416] sm:$0xff]
  %s418 = scalar_lea.vmem %s1, 104
  %419 = vst [vmem:[%s418] sm:$0xff] %v417
  %s420 = scalar_lea.vmem %s0, 456
  %v421 = vld [vmem:[%s420] sm:$0xff]
  %s422 = scalar_lea.vmem %s1, 552
  %423 = vst [vmem:[%s422] sm:$0xff] %v421
  %s424 = scalar_lea.vmem %s0, 120
  %v425 = vld [vmem:[%s424] sm:$0xff]
  %s426 = scalar_lea.vmem %s1, 216
  %427 = vst [vmem:[%s426] sm:$0xff] %v425
  %s428 = scalar_lea.vmem %s0, 568
  %v429 = vld [vmem:[%s428] sm:$0xff]
  %s430 = scalar_lea.vmem %s1, 664
  %431 = vst [vmem:[%s430] sm:$0xff] %v429
  %s432 = scalar_lea.vmem %s0, 232
  %v433 = vld [vmem:[%s432] sm:$0xff]
  %s434 = scalar_lea.vmem %s1, 328
  %435 = vst [vmem:[%s434] sm:$0xff] %v433
  %s436 = scalar_lea.vmem %s0, 680
  %v437 = vld [vmem:[%s436] sm:$0xff]
  %s438 = scalar_lea.vmem %s1, 776
  %439 = vst [vmem:[%s438] sm:$0xff] %v437
  %s440 = scalar_lea.vmem %s0, 344
  %v441 = vld [vmem:[%s440] sm:$0xff]
  %s442 = scalar_lea.vmem %s1, 440
  %443 = vst [vmem:[%s442] sm:$0xff] %v441
  %s444 = scalar_lea.vmem %s0, 792
  %v445 = vld [vmem:[%s444] sm:$0xff]
  %s446 = scalar_lea.vmem %s1, 888
  %447 = vst [vmem:[%s446] sm:$0xff] %v445

</llo_original>
